<compile_context>
chip_gen: v7x
topology: tpu7x:2x2x1
jax: 0.10.0
libtpu: 0.0.40
codegen_flags: <defaults>
</compile_context>

<pallas_src>
import functools

import jax
import jax.numpy as jnp
from jax import lax
from jax.experimental import pallas as pl
from jax.experimental.pallas import tpu as pltpu

LANE = 128                  # pad channel / vocab dims to multiples of this
SUBLANE = 8
MXU_DTYPE = jnp.bfloat16    # MXU operand dtype (set jnp.float32 for exact-f32)
LN_EPS = 1e-5


def _round_up(x, m):
    return ((x + m - 1) // m) * m


# ----------------------------------------------------------------------------
# Fused kernel: gather-embed -> L x (causal conv -> ReLU -> LayerNorm [+res])
#               -> LM head.  One grid step == one batch sequence.
# ----------------------------------------------------------------------------
def fused_lm_kernel(tok_ref, embed_hbm, conv_w_ref, conv_b_ref, gamma_ref,
                    beta_ref, head_w_ref, head_b_ref, out_ref,
                    x0_ref, act_ref, gather_sem, *,
                    n_layers, kernel_size, seq_len, d_true, vocab_true,
                    residual, pad_rows):
    """Refs:
      tok_ref:     (B*T,) int32  SMEM (scalar-prefetched tokens)
      embed_hbm:   (Vp, Dp) f32  HBM/ANY (row-gathered by DMA, never auto-DMAed)
      conv_w_ref:  (L, K*Dp, Dp) bf16 VMEM  (tap-major folded conv weights)
      conv_b_ref:  (L, 1, Dp) f32, gamma_ref/beta_ref: (L, 1, Dp) f32
      head_w_ref:  (Dp, Vp) bf16, head_b_ref: (1, Vp) f32
      out_ref:     (T, Vp) f32   logits block of this sequence
      x0_ref:      (T, Dp) f32   gather landing buffer (scratch)
      act_ref:     (pad_rows+T, Dp) f32 causal-shift scratch (zero margin)
      gather_sem:  scalar DMA semaphore
    """
    T = seq_len
    d_pad = act_ref.shape[1]
    K = kernel_size
    b = pl.program_id(0)

    # ---- 1) Embedding: real per-row DMA gather from HBM (review item 1) ----
    copies = []
    for i in range(T):
        tok = tok_ref[b * T + i]
        tok = jnp.clip(tok, 0, vocab_true - 1)      # OOB-token safety
        cp = pltpu.make_async_copy(embed_hbm.at[pl.ds(tok, 1), :],
                                   x0_ref.at[pl.ds(i, 1), :],
                                   gather_sem)
        cp.start()
        copies.append(cp)

    # Zero the causal left margin while the gather DMAs are in flight.
    # (Re-done every step: under megacore each core owns its own scratch.)
    act_ref[0:pad_rows, :] = jnp.zeros((pad_rows, d_pad), jnp.float32)

    for cp in copies:
        cp.wait()
    x = x0_ref[...]                                  # (T, Dp) f32; pad chans 0

    inv_d = 1.0 / float(d_true)

    # ---- 2) Stacked causal conv blocks (static unroll; L is small) ---------
    for l in range(n_layers):
        # Sublane-aligned store below the zero margin; K causal tap windows.
        act_ref[pl.ds(pad_rows, T), :] = x
        taps = [act_ref[pl.ds(pad_rows - (K - 1 - k), T), :] for k in range(K)]
        xs = jnp.concatenate(taps, axis=-1).astype(MXU_DTYPE)   # (T, K*Dp)

        # One wide MXU contraction per layer (bf16 operands, f32 accum).
        acc = jnp.dot(xs, conv_w_ref[l],
                      preferred_element_type=jnp.float32)       # (T, Dp)

        # Bias + ReLU (f32).  Padded channels stay exactly 0.
        h = jnp.maximum(acc + conv_b_ref[l], 0.0)

        # LayerNorm over the true d_true channels, no channel mask (item 3).
        s1 = jnp.sum(h, axis=-1, keepdims=True)
        s2 = jnp.sum(h * h, axis=-1, keepdims=True)
        mean = s1 * inv_d
        var = jnp.maximum(s2 * inv_d - mean * mean, 0.0)
        y = (h - mean) * lax.rsqrt(var + LN_EPS) * gamma_ref[l] + beta_ref[l]

        x = y + x if residual else y

    # ---- 3) LM head: (T, Dp) @ (Dp, Vp) + bias, lane-dense store -----------
    logits = jnp.dot(x.astype(MXU_DTYPE), head_w_ref[...],
                     preferred_element_type=jnp.float32) + head_b_ref[...]
    out_ref[...] = logits.astype(out_ref.dtype)


# ----------------------------------------------------------------------------
# Parameter packing (done once): pad to lane width, fold taps, stack layers.
# ----------------------------------------------------------------------------
def pack_params(raw, *, d_pad, v_pad, mxu_dtype=MXU_DTYPE):
    D = raw["embed"].shape[1]
    V = raw["embed"].shape[0]
    K = raw["blocks"][0]["w"].shape[0]

    embed_p = jnp.zeros((v_pad, d_pad), jnp.float32).at[:V, :D].set(raw["embed"])

    conv_w, conv_b, gamma, beta = [], [], [], []
    for blk in raw["blocks"]:
        w = jnp.zeros((K, d_pad, d_pad), jnp.float32).at[:, :D, :D].set(blk["w"])
        conv_w.append(w.reshape(K * d_pad, d_pad))    # row k*Dp+cin -> tap k, cin
        conv_b.append(jnp.zeros((d_pad,), jnp.float32).at[:D].set(blk["b"]))
        gamma.append(jnp.zeros((d_pad,), jnp.float32).at[:D].set(blk["gamma"]))
        beta.append(jnp.zeros((d_pad,), jnp.float32).at[:D].set(blk["beta"]))

    head_w = jnp.zeros((d_pad, v_pad), jnp.float32).at[:D, :V].set(raw["head_w"])
    head_b = jnp.zeros((v_pad,), jnp.float32).at[:V].set(raw["head_b"])

    return dict(
        embed=embed_p,                                  # (Vp, Dp) f32 (HBM)
        conv_w=jnp.stack(conv_w).astype(mxu_dtype),     # (L, K*Dp, Dp)
        conv_b=jnp.stack(conv_b)[:, None, :],           # (L, 1, Dp) f32
        gamma=jnp.stack(gamma)[:, None, :],             # (L, 1, Dp) f32
        beta=jnp.stack(beta)[:, None, :],               # (L, 1, Dp) f32
        head_w=head_w.astype(mxu_dtype),                # (Dp, Vp)
        head_b=head_b[None, :],                         # (1, Vp) f32
    )


# ----------------------------------------------------------------------------
# Forward wrapper: single pallas_call, grid over batch ("parallel").
# ----------------------------------------------------------------------------
def causal_conv_language_model(tokens, packed, *, kernel_size, residual,
                               d_model, vocab_size):
    B, T = tokens.shape
    d_pad = packed["embed"].shape[1]
    v_pad = packed["head_w"].shape[1]
    n_layers = packed["conv_w"].shape[0]
    assert T % SUBLANE == 0, "pad T to a multiple of 8 before calling the kernel"
    pad_rows = _round_up(max(kernel_size - 1, 1), SUBLANE)
    assert pad_rows >= kernel_size - 1

    kern = functools.partial(
        fused_lm_kernel, n_layers=n_layers, kernel_size=kernel_size,
        seq_len=T, d_true=d_model, vocab_true=vocab_size,
        residual=residual, pad_rows=pad_rows)

    tok_flat = tokens.reshape(B * T).astype(jnp.int32)

    # VMEM budget derived from actual bytes (+ headroom), not a fixed constant.
    def _nbytes(a):
        return int(a.size) * a.dtype.itemsize
    resident = sum(_nbytes(packed[k]) for k in
                   ("conv_w", "conv_b", "gamma", "beta", "head_w", "head_b"))
    out_block = T * v_pad * 4
    scratch = (pad_rows + T) * d_pad * 4 + T * d_pad * 4
    vmem_limit = min(int(2 * (resident + out_block) + scratch) + (16 << 20),
                     96 * 1024 * 1024)

    logits_pad = pl.pallas_call(
        kern,
        out_shape=jax.ShapeDtypeStruct((B * T, v_pad), jnp.float32),
        grid_spec=pltpu.PrefetchScalarGridSpec(
            num_scalar_prefetch=1,            # tokens -> SMEM, gather indices
            grid=(B,),                        # one step == one sequence
            in_specs=[
                pl.BlockSpec(memory_space=pl.ANY),                  # embed stays in HBM
                pl.BlockSpec(packed["conv_w"].shape, lambda b, tok: (0, 0, 0)),
                pl.BlockSpec(packed["conv_b"].shape, lambda b, tok: (0, 0, 0)),
                pl.BlockSpec(packed["gamma"].shape, lambda b, tok: (0, 0, 0)),
                pl.BlockSpec(packed["beta"].shape, lambda b, tok: (0, 0, 0)),
                pl.BlockSpec(packed["head_w"].shape, lambda b, tok: (0, 0)),
                pl.BlockSpec(packed["head_b"].shape, lambda b, tok: (0, 0)),
            ],
            out_specs=pl.BlockSpec((T, v_pad), lambda b, tok: (b, 0)),
            scratch_shapes=[
                pltpu.VMEM((T, d_pad), jnp.float32),                # gather buffer
                pltpu.VMEM((pad_rows + T, d_pad), jnp.float32),     # causal-shift scratch
                pltpu.SemaphoreType.DMA(()),                        # gather DMA sem
            ],
        ),
        compiler_params=pltpu.CompilerParams(
            dimension_semantics=("parallel",),   # 2 TCs on v7x; pipelined writeback
            vmem_limit_bytes=vmem_limit,
        ),
    )(tok_flat, packed["embed"], packed["conv_w"], packed["conv_b"],
      packed["gamma"], packed["beta"], packed["head_w"], packed["head_b"])

    # Drop lane padding of the vocab dim (layout plumbing outside the kernel).
    return logits_pad.reshape(B, T, v_pad)[:, :, :vocab_size]


# ----------------------------------------------------------------------------
# Pure-JAX reference mirroring the PyTorch forward.  Matmul operands use the
# same MXU_DTYPE policy as the kernel (f32 accumulation).
# ----------------------------------------------------------------------------
def reference_model(tokens, raw, *, kernel_size, residual,
                    mxu_dtype=MXU_DTYPE):
    K = kernel_size
    x = raw["embed"][tokens]                                    # (B, T, D) f32
    for blk in raw["blocks"]:
        B, T, D = x.shape
        xz = jnp.concatenate([jnp.zeros((B, K - 1, D), x.dtype), x], axis=1)
        acc = jnp.zeros((B, T, D), jnp.float32)
        for k in range(K):
            acc = acc + jnp.einsum(
                "btd,de->bte",
                xz[:, k:k + T, :].astype(mxu_dtype),
                blk["w"][k].astype(mxu_dtype),
                preferred_element_type=jnp.float32)
        h = jnp.maximum(acc + blk["b"], 0.0)
        mean = jnp.mean(h, axis=-1, keepdims=True)
        var = jnp.mean((h - mean) ** 2, axis=-1, keepdims=True)
        out = (h - mean) * lax.rsqrt(var + LN_EPS) * blk["gamma"] + blk["beta"]
        x = out + x if residual else out
    logits = jnp.einsum("btd,dv->btv", x.astype(mxu_dtype),
                        raw["head_w"].astype(mxu_dtype),
                        preferred_element_type=jnp.float32) + raw["head_b"]
    return logits


# ----------------------------------------------------------------------------
# Main
# ----------------------------------------------------------------------------
if __name__ == "__main__":
    B, T = 2, 16
    VOCAB, D_MODEL, N_LAYERS, KSIZE = 64, 32, 2, 3
    RESIDUAL = False

    key = jax.random.PRNGKey(0)
    keys = jax.random.split(key, 3 + 4 * N_LAYERS)

    # Deterministic synthetic parameters (shapes follow the nn.Module __init__).
    embed = jax.random.normal(keys[0], (VOCAB, D_MODEL), jnp.float32) * 0.1
    blocks = []
    for i in range(N_LAYERS):
        kw, kb, kg, kbt = keys[3 + 4 * i: 3 + 4 * (i + 1)]
        # PyTorch Conv1d weight is (C_out, C_in, K) -> reorder to (K, C_in, C_out)
        w_torch = jax.random.normal(kw, (D_MODEL, D_MODEL, KSIZE), jnp.float32) * 0.05
        blocks.append(dict(
            w=jnp.transpose(w_torch, (2, 1, 0)),                    # (K, D, D)
            b=jax.random.normal(kb, (D_MODEL,), jnp.float32) * 0.05,
            gamma=1.0 + 0.1 * jax.random.normal(kg, (D_MODEL,), jnp.float32),
            beta=0.1 * jax.random.normal(kbt, (D_MODEL,), jnp.float32),
        ))
    head_w = jax.random.normal(keys[1], (D_MODEL, VOCAB), jnp.float32) * 0.05
    head_b = jax.random.normal(keys[2], (VOCAB,), jnp.float32) * 0.05
    raw = dict(embed=embed, blocks=blocks, head_w=head_w, head_b=head_b)

    tokens = jax.random.randint(jax.random.PRNGKey(42), (B, T), 0, VOCAB, jnp.int32)

    packed = pack_params(raw,
                         d_pad=_round_up(D_MODEL, LANE),
                         v_pad=_round_up(VOCAB, LANE))

    logits = causal_conv_language_model(tokens, packed, kernel_size=KSIZE,
                                        residual=RESIDUAL, d_model=D_MODEL,
                                        vocab_size=VOCAB)
    logits = jax.block_until_ready(logits)

    ref = reference_model(tokens, raw, kernel_size=KSIZE, residual=RESIDUAL)
    assert logits.shape == (B, T, VOCAB), logits.shape
    assert jnp.allclose(logits, ref, atol=5e-3, rtol=5e-3), \
        "mismatch vs reference (max abs diff %.3e)" % float(jnp.max(jnp.abs(logits - ref)))

    print("KERNEL_OK")
</pallas_src>

<mosaic_0001>
module attributes {stable_mosaic.version = 11 : i64} {
  func.func @fused_lm_kernel(%arg0: i32, %arg1: memref<32xi32, #tpu.memory_space<smem>>, %arg2: memref<128x128xf32, #tpu.memory_space<any>>, %arg3: memref<2x384x128xbf16, #tpu.memory_space<vmem>>, %arg4: memref<2x1x128xf32, #tpu.memory_space<vmem>>, %arg5: memref<2x1x128xf32, #tpu.memory_space<vmem>>, %arg6: memref<2x1x128xf32, #tpu.memory_space<vmem>>, %arg7: memref<128x128xbf16, #tpu.memory_space<vmem>>, %arg8: memref<1x128xf32, #tpu.memory_space<vmem>>, %arg9: memref<16x128xf32, #tpu.memory_space<vmem>>, %arg10: memref<16x128xf32, #tpu.memory_space<vmem>>, %arg11: memref<24x128xf32, #tpu.memory_space<vmem>>, %arg12: memref<!tpu.dma_semaphore, #tpu.memory_space<semaphore_mem>>) attributes {dimension_semantics = [#tpu.dimension_semantics<parallel>], iteration_bounds = array<i64: 2>, scalar_prefetch = 1 : i64, scratch_operands = 3 : i64, tpu.core_type = #tpu.core_type<tc>, window_params = [{}, {pipeline_mode = #tpu.pipeline_mode<synchronous>, transform_indices = @transform_1, window_bounds = array<i64: 2, 384, 128>}, {pipeline_mode = #tpu.pipeline_mode<synchronous>, transform_indices = @transform_2, window_bounds = array<i64: 2, 1, 128>}, {pipeline_mode = #tpu.pipeline_mode<synchronous>, transform_indices = @transform_3, window_bounds = array<i64: 2, 1, 128>}, {pipeline_mode = #tpu.pipeline_mode<synchronous>, transform_indices = @transform_4, window_bounds = array<i64: 2, 1, 128>}, {pipeline_mode = #tpu.pipeline_mode<synchronous>, transform_indices = @transform_5, window_bounds = array<i64: 128, 128>}, {pipeline_mode = #tpu.pipeline_mode<synchronous>, transform_indices = @transform_6, window_bounds = array<i64: 1, 128>}, {transform_indices = @transform_7, window_bounds = array<i64: 16, 128>}]} {
    %c16_i32 = arith.constant 16 : i32
    %0 = arith.muli %arg0, %c16_i32 : i32
    %c0_i32 = arith.constant 0 : i32
    %1 = arith.addi %0, %c0_i32 : i32
    %2 = arith.index_cast %1 : i32 to index
    %3 = memref.load %arg1[%2] : memref<32xi32, #tpu.memory_space<smem>>
    %c0_i32_0 = arith.constant 0 : i32
    %c63_i32 = arith.constant 63 : i32
    %4 = arith.maxsi %c0_i32_0, %3 : i32
    %5 = arith.minsi %c63_i32, %4 : i32
    %c0_i32_1 = arith.constant 0 : i32
    %6 = tpu.memref_slice %arg2[%5, %c0_i32_1] : memref<128x128xf32, #tpu.memory_space<any>> -> memref<1x128xf32, #tpu.memory_space<any>>
    %c0_i32_2 = arith.constant 0 : i32
    %c0_i32_3 = arith.constant 0 : i32
    %7 = tpu.memref_slice %arg10[%c0_i32_2, %c0_i32_3] : memref<16x128xf32, #tpu.memory_space<vmem>> -> memref<1x128xf32, #tpu.memory_space<vmem>>
    tpu.enqueue_dma source(%6 : memref<1x128xf32, #tpu.memory_space<any>>) target(%7 : memref<1x128xf32, #tpu.memory_space<vmem>>) target_semaphore(%arg12 : memref<!tpu.dma_semaphore, #tpu.memory_space<semaphore_mem>>)
    %c16_i32_4 = arith.constant 16 : i32
    %8 = arith.muli %arg0, %c16_i32_4 : i32
    %c1_i32 = arith.constant 1 : i32
    %9 = arith.addi %8, %c1_i32 : i32
    %10 = arith.index_cast %9 : i32 to index
    %11 = memref.load %arg1[%10] : memref<32xi32, #tpu.memory_space<smem>>
    %c0_i32_5 = arith.constant 0 : i32
    %c63_i32_6 = arith.constant 63 : i32
    %12 = arith.maxsi %c0_i32_5, %11 : i32
    %13 = arith.minsi %c63_i32_6, %12 : i32
    %c0_i32_7 = arith.constant 0 : i32
    %14 = tpu.memref_slice %arg2[%13, %c0_i32_7] : memref<128x128xf32, #tpu.memory_space<any>> -> memref<1x128xf32, #tpu.memory_space<any>>
    %c1_i32_8 = arith.constant 1 : i32
    %c0_i32_9 = arith.constant 0 : i32
    %15 = tpu.memref_slice %arg10[%c1_i32_8, %c0_i32_9] : memref<16x128xf32, #tpu.memory_space<vmem>> -> memref<1x128xf32, #tpu.memory_space<vmem>>
    tpu.enqueue_dma source(%14 : memref<1x128xf32, #tpu.memory_space<any>>) target(%15 : memref<1x128xf32, #tpu.memory_space<vmem>>) target_semaphore(%arg12 : memref<!tpu.dma_semaphore, #tpu.memory_space<semaphore_mem>>)
    %c16_i32_10 = arith.constant 16 : i32
    %16 = arith.muli %arg0, %c16_i32_10 : i32
    %c2_i32 = arith.constant 2 : i32
    %17 = arith.addi %16, %c2_i32 : i32
    %18 = arith.index_cast %17 : i32 to index
    %19 = memref.load %arg1[%18] : memref<32xi32, #tpu.memory_space<smem>>
    %c0_i32_11 = arith.constant 0 : i32
    %c63_i32_12 = arith.constant 63 : i32
    %20 = arith.maxsi %c0_i32_11, %19 : i32
    %21 = arith.minsi %c63_i32_12, %20 : i32
    %c0_i32_13 = arith.constant 0 : i32
    %22 = tpu.memref_slice %arg2[%21, %c0_i32_13] : memref<128x128xf32, #tpu.memory_space<any>> -> memref<1x128xf32, #tpu.memory_space<any>>
    %c2_i32_14 = arith.constant 2 : i32
    %c0_i32_15 = arith.constant 0 : i32
    %23 = tpu.memref_slice %arg10[%c2_i32_14, %c0_i32_15] : memref<16x128xf32, #tpu.memory_space<vmem>> -> memref<1x128xf32, #tpu.memory_space<vmem>>
    tpu.enqueue_dma source(%22 : memref<1x128xf32, #tpu.memory_space<any>>) target(%23 : memref<1x128xf32, #tpu.memory_space<vmem>>) target_semaphore(%arg12 : memref<!tpu.dma_semaphore, #tpu.memory_space<semaphore_mem>>)
    %c16_i32_16 = arith.constant 16 : i32
    %24 = arith.muli %arg0, %c16_i32_16 : i32
    %c3_i32 = arith.constant 3 : i32
    %25 = arith.addi %24, %c3_i32 : i32
    %26 = arith.index_cast %25 : i32 to index
    %27 = memref.load %arg1[%26] : memref<32xi32, #tpu.memory_space<smem>>
    %c0_i32_17 = arith.constant 0 : i32
    %c63_i32_18 = arith.constant 63 : i32
    %28 = arith.maxsi %c0_i32_17, %27 : i32
    %29 = arith.minsi %c63_i32_18, %28 : i32
    %c0_i32_19 = arith.constant 0 : i32
    %30 = tpu.memref_slice %arg2[%29, %c0_i32_19] : memref<128x128xf32, #tpu.memory_space<any>> -> memref<1x128xf32, #tpu.memory_space<any>>
    %c3_i32_20 = arith.constant 3 : i32
    %c0_i32_21 = arith.constant 0 : i32
    %31 = tpu.memref_slice %arg10[%c3_i32_20, %c0_i32_21] : memref<16x128xf32, #tpu.memory_space<vmem>> -> memref<1x128xf32, #tpu.memory_space<vmem>>
    tpu.enqueue_dma source(%30 : memref<1x128xf32, #tpu.memory_space<any>>) target(%31 : memref<1x128xf32, #tpu.memory_space<vmem>>) target_semaphore(%arg12 : memref<!tpu.dma_semaphore, #tpu.memory_space<semaphore_mem>>)
    %c16_i32_22 = arith.constant 16 : i32
    %32 = arith.muli %arg0, %c16_i32_22 : i32
    %c4_i32 = arith.constant 4 : i32
    %33 = arith.addi %32, %c4_i32 : i32
    %34 = arith.index_cast %33 : i32 to index
    %35 = memref.load %arg1[%34] : memref<32xi32, #tpu.memory_space<smem>>
    %c0_i32_23 = arith.constant 0 : i32
    %c63_i32_24 = arith.constant 63 : i32
    %36 = arith.maxsi %c0_i32_23, %35 : i32
    %37 = arith.minsi %c63_i32_24, %36 : i32
    %c0_i32_25 = arith.constant 0 : i32
    %38 = tpu.memref_slice %arg2[%37, %c0_i32_25] : memref<128x128xf32, #tpu.memory_space<any>> -> memref<1x128xf32, #tpu.memory_space<any>>
    %c4_i32_26 = arith.constant 4 : i32
    %c0_i32_27 = arith.constant 0 : i32
    %39 = tpu.memref_slice %arg10[%c4_i32_26, %c0_i32_27] : memref<16x128xf32, #tpu.memory_space<vmem>> -> memref<1x128xf32, #tpu.memory_space<vmem>>
    tpu.enqueue_dma source(%38 : memref<1x128xf32, #tpu.memory_space<any>>) target(%39 : memref<1x128xf32, #tpu.memory_space<vmem>>) target_semaphore(%arg12 : memref<!tpu.dma_semaphore, #tpu.memory_space<semaphore_mem>>)
    %c16_i32_28 = arith.constant 16 : i32
    %40 = arith.muli %arg0, %c16_i32_28 : i32
    %c5_i32 = arith.constant 5 : i32
    %41 = arith.addi %40, %c5_i32 : i32
    %42 = arith.index_cast %41 : i32 to index
    %43 = memref.load %arg1[%42] : memref<32xi32, #tpu.memory_space<smem>>
    %c0_i32_29 = arith.constant 0 : i32
    %c63_i32_30 = arith.constant 63 : i32
    %44 = arith.maxsi %c0_i32_29, %43 : i32
    %45 = arith.minsi %c63_i32_30, %44 : i32
    %c0_i32_31 = arith.constant 0 : i32
    %46 = tpu.memref_slice %arg2[%45, %c0_i32_31] : memref<128x128xf32, #tpu.memory_space<any>> -> memref<1x128xf32, #tpu.memory_space<any>>
    %c5_i32_32 = arith.constant 5 : i32
    %c0_i32_33 = arith.constant 0 : i32
    %47 = tpu.memref_slice %arg10[%c5_i32_32, %c0_i32_33] : memref<16x128xf32, #tpu.memory_space<vmem>> -> memref<1x128xf32, #tpu.memory_space<vmem>>
    tpu.enqueue_dma source(%46 : memref<1x128xf32, #tpu.memory_space<any>>) target(%47 : memref<1x128xf32, #tpu.memory_space<vmem>>) target_semaphore(%arg12 : memref<!tpu.dma_semaphore, #tpu.memory_space<semaphore_mem>>)
    %c16_i32_34 = arith.constant 16 : i32
    %48 = arith.muli %arg0, %c16_i32_34 : i32
    %c6_i32 = arith.constant 6 : i32
    %49 = arith.addi %48, %c6_i32 : i32
    %50 = arith.index_cast %49 : i32 to index
    %51 = memref.load %arg1[%50] : memref<32xi32, #tpu.memory_space<smem>>
    %c0_i32_35 = arith.constant 0 : i32
    %c63_i32_36 = arith.constant 63 : i32
    %52 = arith.maxsi %c0_i32_35, %51 : i32
    %53 = arith.minsi %c63_i32_36, %52 : i32
    %c0_i32_37 = arith.constant 0 : i32
    %54 = tpu.memref_slice %arg2[%53, %c0_i32_37] : memref<128x128xf32, #tpu.memory_space<any>> -> memref<1x128xf32, #tpu.memory_space<any>>
    %c6_i32_38 = arith.constant 6 : i32
    %c0_i32_39 = arith.constant 0 : i32
    %55 = tpu.memref_slice %arg10[%c6_i32_38, %c0_i32_39] : memref<16x128xf32, #tpu.memory_space<vmem>> -> memref<1x128xf32, #tpu.memory_space<vmem>>
    tpu.enqueue_dma source(%54 : memref<1x128xf32, #tpu.memory_space<any>>) target(%55 : memref<1x128xf32, #tpu.memory_space<vmem>>) target_semaphore(%arg12 : memref<!tpu.dma_semaphore, #tpu.memory_space<semaphore_mem>>)
    %c16_i32_40 = arith.constant 16 : i32
    %56 = arith.muli %arg0, %c16_i32_40 : i32
    %c7_i32 = arith.constant 7 : i32
    %57 = arith.addi %56, %c7_i32 : i32
    %58 = arith.index_cast %57 : i32 to index
    %59 = memref.load %arg1[%58] : memref<32xi32, #tpu.memory_space<smem>>
    %c0_i32_41 = arith.constant 0 : i32
    %c63_i32_42 = arith.constant 63 : i32
    %60 = arith.maxsi %c0_i32_41, %59 : i32
    %61 = arith.minsi %c63_i32_42, %60 : i32
    %c0_i32_43 = arith.constant 0 : i32
    %62 = tpu.memref_slice %arg2[%61, %c0_i32_43] : memref<128x128xf32, #tpu.memory_space<any>> -> memref<1x128xf32, #tpu.memory_space<any>>
    %c7_i32_44 = arith.constant 7 : i32
    %c0_i32_45 = arith.constant 0 : i32
    %63 = tpu.memref_slice %arg10[%c7_i32_44, %c0_i32_45] : memref<16x128xf32, #tpu.memory_space<vmem>> -> memref<1x128xf32, #tpu.memory_space<vmem>>
    tpu.enqueue_dma source(%62 : memref<1x128xf32, #tpu.memory_space<any>>) target(%63 : memref<1x128xf32, #tpu.memory_space<vmem>>) target_semaphore(%arg12 : memref<!tpu.dma_semaphore, #tpu.memory_space<semaphore_mem>>)
    %c16_i32_46 = arith.constant 16 : i32
    %64 = arith.muli %arg0, %c16_i32_46 : i32
    %c8_i32 = arith.constant 8 : i32
    %65 = arith.addi %64, %c8_i32 : i32
    %66 = arith.index_cast %65 : i32 to index
    %67 = memref.load %arg1[%66] : memref<32xi32, #tpu.memory_space<smem>>
    %c0_i32_47 = arith.constant 0 : i32
    %c63_i32_48 = arith.constant 63 : i32
    %68 = arith.maxsi %c0_i32_47, %67 : i32
    %69 = arith.minsi %c63_i32_48, %68 : i32
    %c0_i32_49 = arith.constant 0 : i32
    %70 = tpu.memref_slice %arg2[%69, %c0_i32_49] : memref<128x128xf32, #tpu.memory_space<any>> -> memref<1x128xf32, #tpu.memory_space<any>>
    %c8_i32_50 = arith.constant 8 : i32
    %c0_i32_51 = arith.constant 0 : i32
    %71 = tpu.memref_slice %arg10[%c8_i32_50, %c0_i32_51] : memref<16x128xf32, #tpu.memory_space<vmem>> -> memref<1x128xf32, #tpu.memory_space<vmem>>
    tpu.enqueue_dma source(%70 : memref<1x128xf32, #tpu.memory_space<any>>) target(%71 : memref<1x128xf32, #tpu.memory_space<vmem>>) target_semaphore(%arg12 : memref<!tpu.dma_semaphore, #tpu.memory_space<semaphore_mem>>)
    %c16_i32_52 = arith.constant 16 : i32
    %72 = arith.muli %arg0, %c16_i32_52 : i32
    %c9_i32 = arith.constant 9 : i32
    %73 = arith.addi %72, %c9_i32 : i32
    %74 = arith.index_cast %73 : i32 to index
    %75 = memref.load %arg1[%74] : memref<32xi32, #tpu.memory_space<smem>>
    %c0_i32_53 = arith.constant 0 : i32
    %c63_i32_54 = arith.constant 63 : i32
    %76 = arith.maxsi %c0_i32_53, %75 : i32
    %77 = arith.minsi %c63_i32_54, %76 : i32
    %c0_i32_55 = arith.constant 0 : i32
    %78 = tpu.memref_slice %arg2[%77, %c0_i32_55] : memref<128x128xf32, #tpu.memory_space<any>> -> memref<1x128xf32, #tpu.memory_space<any>>
    %c9_i32_56 = arith.constant 9 : i32
    %c0_i32_57 = arith.constant 0 : i32
    %79 = tpu.memref_slice %arg10[%c9_i32_56, %c0_i32_57] : memref<16x128xf32, #tpu.memory_space<vmem>> -> memref<1x128xf32, #tpu.memory_space<vmem>>
    tpu.enqueue_dma source(%78 : memref<1x128xf32, #tpu.memory_space<any>>) target(%79 : memref<1x128xf32, #tpu.memory_space<vmem>>) target_semaphore(%arg12 : memref<!tpu.dma_semaphore, #tpu.memory_space<semaphore_mem>>)
    %c16_i32_58 = arith.constant 16 : i32
    %80 = arith.muli %arg0, %c16_i32_58 : i32
    %c10_i32 = arith.constant 10 : i32
    %81 = arith.addi %80, %c10_i32 : i32
    %82 = arith.index_cast %81 : i32 to index
    %83 = memref.load %arg1[%82] : memref<32xi32, #tpu.memory_space<smem>>
    %c0_i32_59 = arith.constant 0 : i32
    %c63_i32_60 = arith.constant 63 : i32
    %84 = arith.maxsi %c0_i32_59, %83 : i32
    %85 = arith.minsi %c63_i32_60, %84 : i32
    %c0_i32_61 = arith.constant 0 : i32
    %86 = tpu.memref_slice %arg2[%85, %c0_i32_61] : memref<128x128xf32, #tpu.memory_space<any>> -> memref<1x128xf32, #tpu.memory_space<any>>
    %c10_i32_62 = arith.constant 10 : i32
    %c0_i32_63 = arith.constant 0 : i32
    %87 = tpu.memref_slice %arg10[%c10_i32_62, %c0_i32_63] : memref<16x128xf32, #tpu.memory_space<vmem>> -> memref<1x128xf32, #tpu.memory_space<vmem>>
    tpu.enqueue_dma source(%86 : memref<1x128xf32, #tpu.memory_space<any>>) target(%87 : memref<1x128xf32, #tpu.memory_space<vmem>>) target_semaphore(%arg12 : memref<!tpu.dma_semaphore, #tpu.memory_space<semaphore_mem>>)
    %c16_i32_64 = arith.constant 16 : i32
    %88 = arith.muli %arg0, %c16_i32_64 : i32
    %c11_i32 = arith.constant 11 : i32
    %89 = arith.addi %88, %c11_i32 : i32
    %90 = arith.index_cast %89 : i32 to index
    %91 = memref.load %arg1[%90] : memref<32xi32, #tpu.memory_space<smem>>
    %c0_i32_65 = arith.constant 0 : i32
    %c63_i32_66 = arith.constant 63 : i32
    %92 = arith.maxsi %c0_i32_65, %91 : i32
    %93 = arith.minsi %c63_i32_66, %92 : i32
    %c0_i32_67 = arith.constant 0 : i32
    %94 = tpu.memref_slice %arg2[%93, %c0_i32_67] : memref<128x128xf32, #tpu.memory_space<any>> -> memref<1x128xf32, #tpu.memory_space<any>>
    %c11_i32_68 = arith.constant 11 : i32
    %c0_i32_69 = arith.constant 0 : i32
    %95 = tpu.memref_slice %arg10[%c11_i32_68, %c0_i32_69] : memref<16x128xf32, #tpu.memory_space<vmem>> -> memref<1x128xf32, #tpu.memory_space<vmem>>
    tpu.enqueue_dma source(%94 : memref<1x128xf32, #tpu.memory_space<any>>) target(%95 : memref<1x128xf32, #tpu.memory_space<vmem>>) target_semaphore(%arg12 : memref<!tpu.dma_semaphore, #tpu.memory_space<semaphore_mem>>)
    %c16_i32_70 = arith.constant 16 : i32
    %96 = arith.muli %arg0, %c16_i32_70 : i32
    %c12_i32 = arith.constant 12 : i32
    %97 = arith.addi %96, %c12_i32 : i32
    %98 = arith.index_cast %97 : i32 to index
    %99 = memref.load %arg1[%98] : memref<32xi32, #tpu.memory_space<smem>>
    %c0_i32_71 = arith.constant 0 : i32
    %c63_i32_72 = arith.constant 63 : i32
    %100 = arith.maxsi %c0_i32_71, %99 : i32
    %101 = arith.minsi %c63_i32_72, %100 : i32
    %c0_i32_73 = arith.constant 0 : i32
    %102 = tpu.memref_slice %arg2[%101, %c0_i32_73] : memref<128x128xf32, #tpu.memory_space<any>> -> memref<1x128xf32, #tpu.memory_space<any>>
    %c12_i32_74 = arith.constant 12 : i32
    %c0_i32_75 = arith.constant 0 : i32
    %103 = tpu.memref_slice %arg10[%c12_i32_74, %c0_i32_75] : memref<16x128xf32, #tpu.memory_space<vmem>> -> memref<1x128xf32, #tpu.memory_space<vmem>>
    tpu.enqueue_dma source(%102 : memref<1x128xf32, #tpu.memory_space<any>>) target(%103 : memref<1x128xf32, #tpu.memory_space<vmem>>) target_semaphore(%arg12 : memref<!tpu.dma_semaphore, #tpu.memory_space<semaphore_mem>>)
    %c16_i32_76 = arith.constant 16 : i32
    %104 = arith.muli %arg0, %c16_i32_76 : i32
    %c13_i32 = arith.constant 13 : i32
    %105 = arith.addi %104, %c13_i32 : i32
    %106 = arith.index_cast %105 : i32 to index
    %107 = memref.load %arg1[%106] : memref<32xi32, #tpu.memory_space<smem>>
    %c0_i32_77 = arith.constant 0 : i32
    %c63_i32_78 = arith.constant 63 : i32
    %108 = arith.maxsi %c0_i32_77, %107 : i32
    %109 = arith.minsi %c63_i32_78, %108 : i32
    %c0_i32_79 = arith.constant 0 : i32
    %110 = tpu.memref_slice %arg2[%109, %c0_i32_79] : memref<128x128xf32, #tpu.memory_space<any>> -> memref<1x128xf32, #tpu.memory_space<any>>
    %c13_i32_80 = arith.constant 13 : i32
    %c0_i32_81 = arith.constant 0 : i32
    %111 = tpu.memref_slice %arg10[%c13_i32_80, %c0_i32_81] : memref<16x128xf32, #tpu.memory_space<vmem>> -> memref<1x128xf32, #tpu.memory_space<vmem>>
    tpu.enqueue_dma source(%110 : memref<1x128xf32, #tpu.memory_space<any>>) target(%111 : memref<1x128xf32, #tpu.memory_space<vmem>>) target_semaphore(%arg12 : memref<!tpu.dma_semaphore, #tpu.memory_space<semaphore_mem>>)
    %c16_i32_82 = arith.constant 16 : i32
    %112 = arith.muli %arg0, %c16_i32_82 : i32
    %c14_i32 = arith.constant 14 : i32
    %113 = arith.addi %112, %c14_i32 : i32
    %114 = arith.index_cast %113 : i32 to index
    %115 = memref.load %arg1[%114] : memref<32xi32, #tpu.memory_space<smem>>
    %c0_i32_83 = arith.constant 0 : i32
    %c63_i32_84 = arith.constant 63 : i32
    %116 = arith.maxsi %c0_i32_83, %115 : i32
    %117 = arith.minsi %c63_i32_84, %116 : i32
    %c0_i32_85 = arith.constant 0 : i32
    %118 = tpu.memref_slice %arg2[%117, %c0_i32_85] : memref<128x128xf32, #tpu.memory_space<any>> -> memref<1x128xf32, #tpu.memory_space<any>>
    %c14_i32_86 = arith.constant 14 : i32
    %c0_i32_87 = arith.constant 0 : i32
    %119 = tpu.memref_slice %arg10[%c14_i32_86, %c0_i32_87] : memref<16x128xf32, #tpu.memory_space<vmem>> -> memref<1x128xf32, #tpu.memory_space<vmem>>
    tpu.enqueue_dma source(%118 : memref<1x128xf32, #tpu.memory_space<any>>) target(%119 : memref<1x128xf32, #tpu.memory_space<vmem>>) target_semaphore(%arg12 : memref<!tpu.dma_semaphore, #tpu.memory_space<semaphore_mem>>)
    %c16_i32_88 = arith.constant 16 : i32
    %120 = arith.muli %arg0, %c16_i32_88 : i32
    %c15_i32 = arith.constant 15 : i32
    %121 = arith.addi %120, %c15_i32 : i32
    %122 = arith.index_cast %121 : i32 to index
    %123 = memref.load %arg1[%122] : memref<32xi32, #tpu.memory_space<smem>>
    %c0_i32_89 = arith.constant 0 : i32
    %c63_i32_90 = arith.constant 63 : i32
    %124 = arith.maxsi %c0_i32_89, %123 : i32
    %125 = arith.minsi %c63_i32_90, %124 : i32
    %c0_i32_91 = arith.constant 0 : i32
    %126 = tpu.memref_slice %arg2[%125, %c0_i32_91] : memref<128x128xf32, #tpu.memory_space<any>> -> memref<1x128xf32, #tpu.memory_space<any>>
    %c15_i32_92 = arith.constant 15 : i32
    %c0_i32_93 = arith.constant 0 : i32
    %127 = tpu.memref_slice %arg10[%c15_i32_92, %c0_i32_93] : memref<16x128xf32, #tpu.memory_space<vmem>> -> memref<1x128xf32, #tpu.memory_space<vmem>>
    tpu.enqueue_dma source(%126 : memref<1x128xf32, #tpu.memory_space<any>>) target(%127 : memref<1x128xf32, #tpu.memory_space<vmem>>) target_semaphore(%arg12 : memref<!tpu.dma_semaphore, #tpu.memory_space<semaphore_mem>>)
    %cst = arith.constant 0.000000e+00 : f32
    %128 = vector.broadcast %cst : f32 to vector<8x128xf32>
    %c0 = arith.constant 0 : index
    %c0_94 = arith.constant 0 : index
    %129 = vector.load %arg11[%c0, %c0_94] : memref<24x128xf32, #tpu.memory_space<vmem>>, vector<8x128xf32>
    tpu.vector_store %arg11[%c0, %c0_94], %128 {strides = array<i32>} : memref<24x128xf32, #tpu.memory_space<vmem>>, vector<8x128xf32>,
    %c0_i32_95 = arith.constant 0 : i32
    %130 = tpu.memref_slice %arg2[%5, %c0_i32_95] : memref<128x128xf32, #tpu.memory_space<any>> -> memref<1x128xf32, #tpu.memory_space<any>>
    %c0_i32_96 = arith.constant 0 : i32
    %c0_i32_97 = arith.constant 0 : i32
    %131 = tpu.memref_slice %arg10[%c0_i32_96, %c0_i32_97] : memref<16x128xf32, #tpu.memory_space<vmem>> -> memref<1x128xf32, #tpu.memory_space<vmem>>
    tpu.wait_dma2 semaphore(%arg12 : memref<!tpu.dma_semaphore, #tpu.memory_space<semaphore_mem>>) src(%130 : memref<1x128xf32, #tpu.memory_space<any>>) dst(%131 : memref<1x128xf32, #tpu.memory_space<vmem>>)
    %c0_i32_98 = arith.constant 0 : i32
    %132 = tpu.memref_slice %arg2[%13, %c0_i32_98] : memref<128x128xf32, #tpu.memory_space<any>> -> memref<1x128xf32, #tpu.memory_space<any>>
    %c1_i32_99 = arith.constant 1 : i32
    %c0_i32_100 = arith.constant 0 : i32
    %133 = tpu.memref_slice %arg10[%c1_i32_99, %c0_i32_100] : memref<16x128xf32, #tpu.memory_space<vmem>> -> memref<1x128xf32, #tpu.memory_space<vmem>>
    tpu.wait_dma2 semaphore(%arg12 : memref<!tpu.dma_semaphore, #tpu.memory_space<semaphore_mem>>) src(%132 : memref<1x128xf32, #tpu.memory_space<any>>) dst(%133 : memref<1x128xf32, #tpu.memory_space<vmem>>)
    %c0_i32_101 = arith.constant 0 : i32
    %134 = tpu.memref_slice %arg2[%21, %c0_i32_101] : memref<128x128xf32, #tpu.memory_space<any>> -> memref<1x128xf32, #tpu.memory_space<any>>
    %c2_i32_102 = arith.constant 2 : i32
    %c0_i32_103 = arith.constant 0 : i32
    %135 = tpu.memref_slice %arg10[%c2_i32_102, %c0_i32_103] : memref<16x128xf32, #tpu.memory_space<vmem>> -> memref<1x128xf32, #tpu.memory_space<vmem>>
    tpu.wait_dma2 semaphore(%arg12 : memref<!tpu.dma_semaphore, #tpu.memory_space<semaphore_mem>>) src(%134 : memref<1x128xf32, #tpu.memory_space<any>>) dst(%135 : memref<1x128xf32, #tpu.memory_space<vmem>>)
    %c0_i32_104 = arith.constant 0 : i32
    %136 = tpu.memref_slice %arg2[%29, %c0_i32_104] : memref<128x128xf32, #tpu.memory_space<any>> -> memref<1x128xf32, #tpu.memory_space<any>>
    %c3_i32_105 = arith.constant 3 : i32
    %c0_i32_106 = arith.constant 0 : i32
    %137 = tpu.memref_slice %arg10[%c3_i32_105, %c0_i32_106] : memref<16x128xf32, #tpu.memory_space<vmem>> -> memref<1x128xf32, #tpu.memory_space<vmem>>
    tpu.wait_dma2 semaphore(%arg12 : memref<!tpu.dma_semaphore, #tpu.memory_space<semaphore_mem>>) src(%136 : memref<1x128xf32, #tpu.memory_space<any>>) dst(%137 : memref<1x128xf32, #tpu.memory_space<vmem>>)
    %c0_i32_107 = arith.constant 0 : i32
    %138 = tpu.memref_slice %arg2[%37, %c0_i32_107] : memref<128x128xf32, #tpu.memory_space<any>> -> memref<1x128xf32, #tpu.memory_space<any>>
    %c4_i32_108 = arith.constant 4 : i32
    %c0_i32_109 = arith.constant 0 : i32
    %139 = tpu.memref_slice %arg10[%c4_i32_108, %c0_i32_109] : memref<16x128xf32, #tpu.memory_space<vmem>> -> memref<1x128xf32, #tpu.memory_space<vmem>>
    tpu.wait_dma2 semaphore(%arg12 : memref<!tpu.dma_semaphore, #tpu.memory_space<semaphore_mem>>) src(%138 : memref<1x128xf32, #tpu.memory_space<any>>) dst(%139 : memref<1x128xf32, #tpu.memory_space<vmem>>)
    %c0_i32_110 = arith.constant 0 : i32
    %140 = tpu.memref_slice %arg2[%45, %c0_i32_110] : memref<128x128xf32, #tpu.memory_space<any>> -> memref<1x128xf32, #tpu.memory_space<any>>
    %c5_i32_111 = arith.constant 5 : i32
    %c0_i32_112 = arith.constant 0 : i32
    %141 = tpu.memref_slice %arg10[%c5_i32_111, %c0_i32_112] : memref<16x128xf32, #tpu.memory_space<vmem>> -> memref<1x128xf32, #tpu.memory_space<vmem>>
    tpu.wait_dma2 semaphore(%arg12 : memref<!tpu.dma_semaphore, #tpu.memory_space<semaphore_mem>>) src(%140 : memref<1x128xf32, #tpu.memory_space<any>>) dst(%141 : memref<1x128xf32, #tpu.memory_space<vmem>>)
    %c0_i32_113 = arith.constant 0 : i32
    %142 = tpu.memref_slice %arg2[%53, %c0_i32_113] : memref<128x128xf32, #tpu.memory_space<any>> -> memref<1x128xf32, #tpu.memory_space<any>>
    %c6_i32_114 = arith.constant 6 : i32
    %c0_i32_115 = arith.constant 0 : i32
    %143 = tpu.memref_slice %arg10[%c6_i32_114, %c0_i32_115] : memref<16x128xf32, #tpu.memory_space<vmem>> -> memref<1x128xf32, #tpu.memory_space<vmem>>
    tpu.wait_dma2 semaphore(%arg12 : memref<!tpu.dma_semaphore, #tpu.memory_space<semaphore_mem>>) src(%142 : memref<1x128xf32, #tpu.memory_space<any>>) dst(%143 : memref<1x128xf32, #tpu.memory_space<vmem>>)
    %c0_i32_116 = arith.constant 0 : i32
    %144 = tpu.memref_slice %arg2[%61, %c0_i32_116] : memref<128x128xf32, #tpu.memory_space<any>> -> memref<1x128xf32, #tpu.memory_space<any>>
    %c7_i32_117 = arith.constant 7 : i32
    %c0_i32_118 = arith.constant 0 : i32
    %145 = tpu.memref_slice %arg10[%c7_i32_117, %c0_i32_118] : memref<16x128xf32, #tpu.memory_space<vmem>> -> memref<1x128xf32, #tpu.memory_space<vmem>>
    tpu.wait_dma2 semaphore(%arg12 : memref<!tpu.dma_semaphore, #tpu.memory_space<semaphore_mem>>) src(%144 : memref<1x128xf32, #tpu.memory_space<any>>) dst(%145 : memref<1x128xf32, #tpu.memory_space<vmem>>)
    %c0_i32_119 = arith.constant 0 : i32
    %146 = tpu.memref_slice %arg2[%69, %c0_i32_119] : memref<128x128xf32, #tpu.memory_space<any>> -> memref<1x128xf32, #tpu.memory_space<any>>
    %c8_i32_120 = arith.constant 8 : i32
    %c0_i32_121 = arith.constant 0 : i32
    %147 = tpu.memref_slice %arg10[%c8_i32_120, %c0_i32_121] : memref<16x128xf32, #tpu.memory_space<vmem>> -> memref<1x128xf32, #tpu.memory_space<vmem>>
    tpu.wait_dma2 semaphore(%arg12 : memref<!tpu.dma_semaphore, #tpu.memory_space<semaphore_mem>>) src(%146 : memref<1x128xf32, #tpu.memory_space<any>>) dst(%147 : memref<1x128xf32, #tpu.memory_space<vmem>>)
    %c0_i32_122 = arith.constant 0 : i32
    %148 = tpu.memref_slice %arg2[%77, %c0_i32_122] : memref<128x128xf32, #tpu.memory_space<any>> -> memref<1x128xf32, #tpu.memory_space<any>>
    %c9_i32_123 = arith.constant 9 : i32
    %c0_i32_124 = arith.constant 0 : i32
    %149 = tpu.memref_slice %arg10[%c9_i32_123, %c0_i32_124] : memref<16x128xf32, #tpu.memory_space<vmem>> -> memref<1x128xf32, #tpu.memory_space<vmem>>
    tpu.wait_dma2 semaphore(%arg12 : memref<!tpu.dma_semaphore, #tpu.memory_space<semaphore_mem>>) src(%148 : memref<1x128xf32, #tpu.memory_space<any>>) dst(%149 : memref<1x128xf32, #tpu.memory_space<vmem>>)
    %c0_i32_125 = arith.constant 0 : i32
    %150 = tpu.memref_slice %arg2[%85, %c0_i32_125] : memref<128x128xf32, #tpu.memory_space<any>> -> memref<1x128xf32, #tpu.memory_space<any>>
    %c10_i32_126 = arith.constant 10 : i32
    %c0_i32_127 = arith.constant 0 : i32
    %151 = tpu.memref_slice %arg10[%c10_i32_126, %c0_i32_127] : memref<16x128xf32, #tpu.memory_space<vmem>> -> memref<1x128xf32, #tpu.memory_space<vmem>>
    tpu.wait_dma2 semaphore(%arg12 : memref<!tpu.dma_semaphore, #tpu.memory_space<semaphore_mem>>) src(%150 : memref<1x128xf32, #tpu.memory_space<any>>) dst(%151 : memref<1x128xf32, #tpu.memory_space<vmem>>)
    %c0_i32_128 = arith.constant 0 : i32
    %152 = tpu.memref_slice %arg2[%93, %c0_i32_128] : memref<128x128xf32, #tpu.memory_space<any>> -> memref<1x128xf32, #tpu.memory_space<any>>
    %c11_i32_129 = arith.constant 11 : i32
    %c0_i32_130 = arith.constant 0 : i32
    %153 = tpu.memref_slice %arg10[%c11_i32_129, %c0_i32_130] : memref<16x128xf32, #tpu.memory_space<vmem>> -> memref<1x128xf32, #tpu.memory_space<vmem>>
    tpu.wait_dma2 semaphore(%arg12 : memref<!tpu.dma_semaphore, #tpu.memory_space<semaphore_mem>>) src(%152 : memref<1x128xf32, #tpu.memory_space<any>>) dst(%153 : memref<1x128xf32, #tpu.memory_space<vmem>>)
    %c0_i32_131 = arith.constant 0 : i32
    %154 = tpu.memref_slice %arg2[%101, %c0_i32_131] : memref<128x128xf32, #tpu.memory_space<any>> -> memref<1x128xf32, #tpu.memory_space<any>>
    %c12_i32_132 = arith.constant 12 : i32
    %c0_i32_133 = arith.constant 0 : i32
    %155 = tpu.memref_slice %arg10[%c12_i32_132, %c0_i32_133] : memref<16x128xf32, #tpu.memory_space<vmem>> -> memref<1x128xf32, #tpu.memory_space<vmem>>
    tpu.wait_dma2 semaphore(%arg12 : memref<!tpu.dma_semaphore, #tpu.memory_space<semaphore_mem>>) src(%154 : memref<1x128xf32, #tpu.memory_space<any>>) dst(%155 : memref<1x128xf32, #tpu.memory_space<vmem>>)
    %c0_i32_134 = arith.constant 0 : i32
    %156 = tpu.memref_slice %arg2[%109, %c0_i32_134] : memref<128x128xf32, #tpu.memory_space<any>> -> memref<1x128xf32, #tpu.memory_space<any>>
    %c13_i32_135 = arith.constant 13 : i32
    %c0_i32_136 = arith.constant 0 : i32
    %157 = tpu.memref_slice %arg10[%c13_i32_135, %c0_i32_136] : memref<16x128xf32, #tpu.memory_space<vmem>> -> memref<1x128xf32, #tpu.memory_space<vmem>>
    tpu.wait_dma2 semaphore(%arg12 : memref<!tpu.dma_semaphore, #tpu.memory_space<semaphore_mem>>) src(%156 : memref<1x128xf32, #tpu.memory_space<any>>) dst(%157 : memref<1x128xf32, #tpu.memory_space<vmem>>)
    %c0_i32_137 = arith.constant 0 : i32
    %158 = tpu.memref_slice %arg2[%117, %c0_i32_137] : memref<128x128xf32, #tpu.memory_space<any>> -> memref<1x128xf32, #tpu.memory_space<any>>
    %c14_i32_138 = arith.constant 14 : i32
    %c0_i32_139 = arith.constant 0 : i32
    %159 = tpu.memref_slice %arg10[%c14_i32_138, %c0_i32_139] : memref<16x128xf32, #tpu.memory_space<vmem>> -> memref<1x128xf32, #tpu.memory_space<vmem>>
    tpu.wait_dma2 semaphore(%arg12 : memref<!tpu.dma_semaphore, #tpu.memory_space<semaphore_mem>>) src(%158 : memref<1x128xf32, #tpu.memory_space<any>>) dst(%159 : memref<1x128xf32, #tpu.memory_space<vmem>>)
    %c0_i32_140 = arith.constant 0 : i32
    %160 = tpu.memref_slice %arg2[%125, %c0_i32_140] : memref<128x128xf32, #tpu.memory_space<any>> -> memref<1x128xf32, #tpu.memory_space<any>>
    %c15_i32_141 = arith.constant 15 : i32
    %c0_i32_142 = arith.constant 0 : i32
    %161 = tpu.memref_slice %arg10[%c15_i32_141, %c0_i32_142] : memref<16x128xf32, #tpu.memory_space<vmem>> -> memref<1x128xf32, #tpu.memory_space<vmem>>
    tpu.wait_dma2 semaphore(%arg12 : memref<!tpu.dma_semaphore, #tpu.memory_space<semaphore_mem>>) src(%160 : memref<1x128xf32, #tpu.memory_space<any>>) dst(%161 : memref<1x128xf32, #tpu.memory_space<vmem>>)
    %c0_143 = arith.constant 0 : index
    %c0_144 = arith.constant 0 : index
    %162 = vector.load %arg10[%c0_143, %c0_144] : memref<16x128xf32, #tpu.memory_space<vmem>>, vector<16x128xf32>
    %c8 = arith.constant 8 : index
    %c0_145 = arith.constant 0 : index
    %163 = vector.load %arg11[%c8, %c0_145] : memref<24x128xf32, #tpu.memory_space<vmem>>, vector<16x128xf32>
    tpu.vector_store %arg11[%c8, %c0_145], %162 {strides = array<i32>} : memref<24x128xf32, #tpu.memory_space<vmem>>, vector<16x128xf32>,
    %c6 = arith.constant 6 : index
    %c0_146 = arith.constant 0 : index
    %164 = vector.load %arg11[%c6, %c0_146] : memref<24x128xf32, #tpu.memory_space<vmem>>, vector<16x128xf32>
    %c7 = arith.constant 7 : index
    %c0_147 = arith.constant 0 : index
    %165 = vector.load %arg11[%c7, %c0_147] : memref<24x128xf32, #tpu.memory_space<vmem>>, vector<16x128xf32>
    %c8_148 = arith.constant 8 : index
    %c0_149 = arith.constant 0 : index
    %166 = vector.load %arg11[%c8_148, %c0_149] : memref<24x128xf32, #tpu.memory_space<vmem>>, vector<16x128xf32>
    %167 = tpu.concatenate %164, %165, %166 in 1 : vector<16x128xf32>, vector<16x128xf32>, vector<16x128xf32> -> vector<16x384xf32>
    %168 = arith.truncf %167 : vector<16x384xf32> to vector<16x384xbf16>
    %c0_150 = arith.constant 0 : index
    %c0_151 = arith.constant 0 : index
    %c0_152 = arith.constant 0 : index
    %169 = vector.load %arg3[%c0_150, %c0_151, %c0_152] : memref<2x384x128xbf16, #tpu.memory_space<vmem>>, vector<1x384x128xbf16>
    %170 = vector.shape_cast %169 : vector<1x384x128xbf16> to vector<384x128xbf16>
    %cst_153 = arith.constant dense<0.000000e+00> : vector<16x128xf32>
    %171 = tpu.matmul %168, %170, %cst_153 {dimension_numbers = #tpu.dot_dimension_numbers<[1], [0], [0], [1], [0, 0, 1, 1], [], []>} : vector<16x384xbf16>, vector<384x128xbf16>, vector<16x128xf32> -> vector<16x128xf32>
    %c0_154 = arith.constant 0 : index
    %c0_155 = arith.constant 0 : index
    %c0_156 = arith.constant 0 : index
    %172 = vector.load %arg4[%c0_154, %c0_155, %c0_156] : memref<2x1x128xf32, #tpu.memory_space<vmem>>, vector<1x1x128xf32>
    %173 = vector.shape_cast %172 : vector<1x1x128xf32> to vector<1x128xf32>
    %174 = vector.broadcast %173 : vector<1x128xf32> to vector<16x128xf32>
    %175 = arith.addf %171, %174 : vector<16x128xf32>
    %cst_157 = arith.constant 0.000000e+00 : f32
    %176 = vector.broadcast %cst_157 : f32 to vector<16x128xf32>
    %177 = arith.maximumf %175, %176 : vector<16x128xf32>
    %cst_158 = arith.constant dense<0.000000e+00> : vector<16xf32>
    %178 = vector.multi_reduction <add>, %177, %cst_158 [1] : vector<16x128xf32> to vector<16xf32>
    %179 = vector.shape_cast %178 : vector<16xf32> to vector<16x1xf32>
    %180 = arith.mulf %177, %177 : vector<16x128xf32>
    %cst_159 = arith.constant dense<0.000000e+00> : vector<16xf32>
    %181 = vector.multi_reduction <add>, %180, %cst_159 [1] : vector<16x128xf32> to vector<16xf32>
    %182 = vector.shape_cast %181 : vector<16xf32> to vector<16x1xf32>
    %cst_160 = arith.constant 3.125000e-02 : f32
    %183 = vector.broadcast %cst_160 : f32 to vector<16x1xf32>
    %184 = arith.mulf %179, %183 : vector<16x1xf32>
    %cst_161 = arith.constant 3.125000e-02 : f32
    %185 = vector.broadcast %cst_161 : f32 to vector<16x1xf32>
    %186 = arith.mulf %182, %185 : vector<16x1xf32>
    %187 = arith.mulf %184, %184 : vector<16x1xf32>
    %188 = arith.subf %186, %187 : vector<16x1xf32>
    %cst_162 = arith.constant 0.000000e+00 : f32
    %189 = vector.broadcast %cst_162 : f32 to vector<16x1xf32>
    %190 = arith.maximumf %188, %189 : vector<16x1xf32>
    %191 = vector.broadcast %184 : vector<16x1xf32> to vector<16x128xf32>
    %192 = arith.subf %177, %191 : vector<16x128xf32>
    %cst_163 = arith.constant 9.99999974E-6 : f32
    %193 = vector.broadcast %cst_163 : f32 to vector<16x1xf32>
    %194 = arith.addf %190, %193 : vector<16x1xf32>
    %195 = math.rsqrt %194 : vector<16x1xf32>
    %196 = vector.broadcast %195 : vector<16x1xf32> to vector<16x128xf32>
    %197 = arith.mulf %192, %196 : vector<16x128xf32>
    %c0_164 = arith.constant 0 : index
    %c0_165 = arith.constant 0 : index
    %c0_166 = arith.constant 0 : index
    %198 = vector.load %arg5[%c0_164, %c0_165, %c0_166] : memref<2x1x128xf32, #tpu.memory_space<vmem>>, vector<1x1x128xf32>
    %199 = vector.shape_cast %198 : vector<1x1x128xf32> to vector<1x128xf32>
    %200 = vector.broadcast %199 : vector<1x128xf32> to vector<16x128xf32>
    %201 = arith.mulf %197, %200 : vector<16x128xf32>
    %c0_167 = arith.constant 0 : index
    %c0_168 = arith.constant 0 : index
    %c0_169 = arith.constant 0 : index
    %202 = vector.load %arg6[%c0_167, %c0_168, %c0_169] : memref<2x1x128xf32, #tpu.memory_space<vmem>>, vector<1x1x128xf32>
    %203 = vector.shape_cast %202 : vector<1x1x128xf32> to vector<1x128xf32>
    %204 = vector.broadcast %203 : vector<1x128xf32> to vector<16x128xf32>
    %205 = arith.addf %201, %204 : vector<16x128xf32>
    %c8_170 = arith.constant 8 : index
    %c0_171 = arith.constant 0 : index
    %206 = vector.load %arg11[%c8_170, %c0_171] : memref<24x128xf32, #tpu.memory_space<vmem>>, vector<16x128xf32>
    tpu.vector_store %arg11[%c8_170, %c0_171], %205 {strides = array<i32>} : memref<24x128xf32, #tpu.memory_space<vmem>>, vector<16x128xf32>,
    %c6_172 = arith.constant 6 : index
    %c0_173 = arith.constant 0 : index
    %207 = vector.load %arg11[%c6_172, %c0_173] : memref<24x128xf32, #tpu.memory_space<vmem>>, vector<16x128xf32>
    %c7_174 = arith.constant 7 : index
    %c0_175 = arith.constant 0 : index
    %208 = vector.load %arg11[%c7_174, %c0_175] : memref<24x128xf32, #tpu.memory_space<vmem>>, vector<16x128xf32>
    %c8_176 = arith.constant 8 : index
    %c0_177 = arith.constant 0 : index
    %209 = vector.load %arg11[%c8_176, %c0_177] : memref<24x128xf32, #tpu.memory_space<vmem>>, vector<16x128xf32>
    %210 = tpu.concatenate %207, %208, %209 in 1 : vector<16x128xf32>, vector<16x128xf32>, vector<16x128xf32> -> vector<16x384xf32>
    %211 = arith.truncf %210 : vector<16x384xf32> to vector<16x384xbf16>
    %c1 = arith.constant 1 : index
    %c0_178 = arith.constant 0 : index
    %c0_179 = arith.constant 0 : index
    %212 = vector.load %arg3[%c1, %c0_178, %c0_179] : memref<2x384x128xbf16, #tpu.memory_space<vmem>>, vector<1x384x128xbf16>
    %213 = vector.shape_cast %212 : vector<1x384x128xbf16> to vector<384x128xbf16>
    %cst_180 = arith.constant dense<0.000000e+00> : vector<16x128xf32>
    %214 = tpu.matmul %211, %213, %cst_180 {dimension_numbers = #tpu.dot_dimension_numbers<[1], [0], [0], [1], [0, 0, 1, 1], [], []>} : vector<16x384xbf16>, vector<384x128xbf16>, vector<16x128xf32> -> vector<16x128xf32>
    %c1_181 = arith.constant 1 : index
    %c0_182 = arith.constant 0 : index
    %c0_183 = arith.constant 0 : index
    %215 = vector.load %arg4[%c1_181, %c0_182, %c0_183] : memref<2x1x128xf32, #tpu.memory_space<vmem>>, vector<1x1x128xf32>
    %216 = vector.shape_cast %215 : vector<1x1x128xf32> to vector<1x128xf32>
    %217 = vector.broadcast %216 : vector<1x128xf32> to vector<16x128xf32>
    %218 = arith.addf %214, %217 : vector<16x128xf32>
    %cst_184 = arith.constant 0.000000e+00 : f32
    %219 = vector.broadcast %cst_184 : f32 to vector<16x128xf32>
    %220 = arith.maximumf %218, %219 : vector<16x128xf32>
    %cst_185 = arith.constant dense<0.000000e+00> : vector<16xf32>
    %221 = vector.multi_reduction <add>, %220, %cst_185 [1] : vector<16x128xf32> to vector<16xf32>
    %222 = vector.shape_cast %221 : vector<16xf32> to vector<16x1xf32>
    %223 = arith.mulf %220, %220 : vector<16x128xf32>
    %cst_186 = arith.constant dense<0.000000e+00> : vector<16xf32>
    %224 = vector.multi_reduction <add>, %223, %cst_186 [1] : vector<16x128xf32> to vector<16xf32>
    %225 = vector.shape_cast %224 : vector<16xf32> to vector<16x1xf32>
    %cst_187 = arith.constant 3.125000e-02 : f32
    %226 = vector.broadcast %cst_187 : f32 to vector<16x1xf32>
    %227 = arith.mulf %222, %226 : vector<16x1xf32>
    %cst_188 = arith.constant 3.125000e-02 : f32
    %228 = vector.broadcast %cst_188 : f32 to vector<16x1xf32>
    %229 = arith.mulf %225, %228 : vector<16x1xf32>
    %230 = arith.mulf %227, %227 : vector<16x1xf32>
    %231 = arith.subf %229, %230 : vector<16x1xf32>
    %cst_189 = arith.constant 0.000000e+00 : f32
    %232 = vector.broadcast %cst_189 : f32 to vector<16x1xf32>
    %233 = arith.maximumf %231, %232 : vector<16x1xf32>
    %234 = vector.broadcast %227 : vector<16x1xf32> to vector<16x128xf32>
    %235 = arith.subf %220, %234 : vector<16x128xf32>
    %cst_190 = arith.constant 9.99999974E-6 : f32
    %236 = vector.broadcast %cst_190 : f32 to vector<16x1xf32>
    %237 = arith.addf %233, %236 : vector<16x1xf32>
    %238 = math.rsqrt %237 : vector<16x1xf32>
    %239 = vector.broadcast %238 : vector<16x1xf32> to vector<16x128xf32>
    %240 = arith.mulf %235, %239 : vector<16x128xf32>
    %c1_191 = arith.constant 1 : index
    %c0_192 = arith.constant 0 : index
    %c0_193 = arith.constant 0 : index
    %241 = vector.load %arg5[%c1_191, %c0_192, %c0_193] : memref<2x1x128xf32, #tpu.memory_space<vmem>>, vector<1x1x128xf32>
    %242 = vector.shape_cast %241 : vector<1x1x128xf32> to vector<1x128xf32>
    %243 = vector.broadcast %242 : vector<1x128xf32> to vector<16x128xf32>
    %244 = arith.mulf %240, %243 : vector<16x128xf32>
    %c1_194 = arith.constant 1 : index
    %c0_195 = arith.constant 0 : index
    %c0_196 = arith.constant 0 : index
    %245 = vector.load %arg6[%c1_194, %c0_195, %c0_196] : memref<2x1x128xf32, #tpu.memory_space<vmem>>, vector<1x1x128xf32>
    %246 = vector.shape_cast %245 : vector<1x1x128xf32> to vector<1x128xf32>
    %247 = vector.broadcast %246 : vector<1x128xf32> to vector<16x128xf32>
    %248 = arith.addf %244, %247 : vector<16x128xf32>
    %249 = arith.truncf %248 : vector<16x128xf32> to vector<16x128xbf16>
    %c0_197 = arith.constant 0 : index
    %c0_198 = arith.constant 0 : index
    %250 = vector.load %arg7[%c0_197, %c0_198] : memref<128x128xbf16, #tpu.memory_space<vmem>>, vector<128x128xbf16>
    %cst_199 = arith.constant dense<0.000000e+00> : vector<16x128xf32>
    %251 = tpu.matmul %249, %250, %cst_199 {dimension_numbers = #tpu.dot_dimension_numbers<[1], [0], [0], [1], [0, 0, 1, 1], [], []>} : vector<16x128xbf16>, vector<128x128xbf16>, vector<16x128xf32> -> vector<16x128xf32>
    %c0_200 = arith.constant 0 : index
    %c0_201 = arith.constant 0 : index
    %252 = vector.load %arg8[%c0_200, %c0_201] : memref<1x128xf32, #tpu.memory_space<vmem>>, vector<1x128xf32>
    %253 = vector.broadcast %252 : vector<1x128xf32> to vector<16x128xf32>
    %254 = arith.addf %251, %253 : vector<16x128xf32>
    %c0_202 = arith.constant 0 : index
    %c0_203 = arith.constant 0 : index
    %255 = vector.load %arg9[%c0_202, %c0_203] : memref<16x128xf32, #tpu.memory_space<vmem>>, vector<16x128xf32>
    tpu.vector_store %arg9[%c0_202, %c0_203], %254 {strides = array<i32>} : memref<16x128xf32, #tpu.memory_space<vmem>>, vector<16x128xf32>,
    return
  }
  func.func @transform_1(%arg0: i32, %arg1: memref<32xi32, #tpu.memory_space<smem>>) -> (i32, i32, i32) {
    %c0_i32 = arith.constant 0 : i32
    %c0_i32_0 = arith.constant 0 : i32
    %c0_i32_1 = arith.constant 0 : i32
    %c0_i32_2 = arith.constant 0 : i32
    return %c0_i32, %c0_i32_0, %c0_i32_1 : i32, i32, i32
  }
  func.func @transform_2(%arg0: i32, %arg1: memref<32xi32, #tpu.memory_space<smem>>) -> (i32, i32, i32) {
    %c0_i32 = arith.constant 0 : i32
    %c0_i32_0 = arith.constant 0 : i32
    %c0_i32_1 = arith.constant 0 : i32
    %c0_i32_2 = arith.constant 0 : i32
    return %c0_i32, %c0_i32_0, %c0_i32_1 : i32, i32, i32
  }
  func.func @transform_3(%arg0: i32, %arg1: memref<32xi32, #tpu.memory_space<smem>>) -> (i32, i32, i32) {
    %c0_i32 = arith.constant 0 : i32
    %c0_i32_0 = arith.constant 0 : i32
    %c0_i32_1 = arith.constant 0 : i32
    %c0_i32_2 = arith.constant 0 : i32
    return %c0_i32, %c0_i32_0, %c0_i32_1 : i32, i32, i32
  }
  func.func @transform_4(%arg0: i32, %arg1: memref<32xi32, #tpu.memory_space<smem>>) -> (i32, i32, i32) {
    %c0_i32 = arith.constant 0 : i32
    %c0_i32_0 = arith.constant 0 : i32
    %c0_i32_1 = arith.constant 0 : i32
    %c0_i32_2 = arith.constant 0 : i32
    return %c0_i32, %c0_i32_0, %c0_i32_1 : i32, i32, i32
  }
  func.func @transform_5(%arg0: i32, %arg1: memref<32xi32, #tpu.memory_space<smem>>) -> (i32, i32) {
    %c0_i32 = arith.constant 0 : i32
    %c0_i32_0 = arith.constant 0 : i32
    %c0_i32_1 = arith.constant 0 : i32
    return %c0_i32, %c0_i32_0 : i32, i32
  }
  func.func @transform_6(%arg0: i32, %arg1: memref<32xi32, #tpu.memory_space<smem>>) -> (i32, i32) {
    %c0_i32 = arith.constant 0 : i32
    %c0_i32_0 = arith.constant 0 : i32
    %c0_i32_1 = arith.constant 0 : i32
    return %c0_i32, %c0_i32_0 : i32, i32
  }
  func.func @transform_7(%arg0: i32, %arg1: memref<32xi32, #tpu.memory_space<smem>>) -> (i32, i32) {
    %c0_i32 = arith.constant 0 : i32
    %c0_i32_0 = arith.constant 0 : i32
    return %arg0, %c0_i32 : i32, i32
  }
}

</mosaic_0001>

<llo_original>
// kernel: tpu_custom_call.1
$region0: #{tpu_custom_call.1}
  #allocation0 [shape = 'u32[]', space=smem, size = 0x4, offset = 0x4, fixed_abs, tag = 'smem constant byte address 0x4 - core index']
  #allocation1 [shape = 'u32[144,128]{1,0:T(1,128)}', space=vmem, size = 0x12000, scoped, tag = 'internal scratch']
  #allocation2 [shape = 'f32[16,128]{1,0:T(8,128)}', space=vmem, size = 0x2000, scoped, tag = 'scratch operand']
  #allocation3 [shape = 'f32[24,128]{1,0:T(8,128)}', space=vmem, size = 0x3000, scoped, tag = 'scratch operand']
  #allocation4 [shape = 's32[1]{0}', space=sflag, size = 0x4, scoped, tag = 'scratch operand']
  #allocation5 [shape = 's32[1]{0}', space=sflag, size = 0x4, scoped, tag = 'scoped memory for tpu_custom_call.1']
  #allocation6 [shape = 'u8[512]{0}', space=smem, size = 0x200, scoped, tag = 'prefetched SMEM operand 0']
  #allocation13 [shape = 's32[]', space=sflag, size = 0x4, offset = 0, fixed_abs, tag = 'sflag constant byte address 0x0 - dummy sync flag']
  #allocation14 [shape = 's32[]', space=sflag, size = 0x4, offset = 0, fixed_abs, tag = 'sflag constant byte address 0x0 - dummy sync flag']
  #allocation15 [shape = 'u32[]', space=smem, size = 0x4, offset = 0x44, fixed_abs, tag = 'smem constant byte address 0x44 - assertion arg 0']
  #allocation16 [shape = 'u32[]', space=smem, size = 0x4, offset = 0x48, fixed_abs, tag = 'smem constant byte address 0x48 - assertion arg 1']
  #allocation17 [shape = 's32[]', space=sflag, size = 0x4, offset = 0, fixed_abs, tag = 'sflag constant byte address 0x0 - dummy sync flag']
  #allocation18 [shape = 's32[]', space=sflag, size = 0x4, offset = 0, fixed_abs, tag = 'sflag constant byte address 0x0 - dummy sync flag']
  #allocation19 [shape = 's32[]', space=sflag, size = 0x4, offset = 0, fixed_abs, tag = 'sflag constant byte address 0x0 - dummy sync flag']
  #allocation20 [shape = 's32[]', space=sflag, size = 0x4, offset = 0, fixed_abs, tag = 'sflag constant byte address 0x0 - dummy sync flag']
  #allocation21 [shape = 's32[]', space=sflag, size = 0x4, offset = 0, fixed_abs, tag = 'sflag constant byte address 0x0 - dummy sync flag']
  #allocation22 [shape = 's32[]', space=sflag, size = 0x4, offset = 0, fixed_abs, tag = 'sflag constant byte address 0x0 - dummy sync flag']
  #allocation23 [shape = 's32[]', space=sflag, size = 0x4, offset = 0, fixed_abs, tag = 'sflag constant byte address 0x0 - dummy sync flag']
  #allocation24 [shape = 's32[]', space=sflag, size = 0x4, offset = 0, fixed_abs, tag = 'sflag constant byte address 0x0 - dummy sync flag']
  #allocation25 [shape = 's32[]', space=sflag, size = 0x4, offset = 0, fixed_abs, tag = 'sflag constant byte address 0x0 - dummy sync flag']
  #allocation26 [shape = 's32[]', space=sflag, size = 0x4, offset = 0, fixed_abs, tag = 'sflag constant byte address 0x0 - dummy sync flag']
  #allocation27 [shape = 's32[]', space=sflag, size = 0x4, offset = 0, fixed_abs, tag = 'sflag constant byte address 0x0 - dummy sync flag']
  #allocation28 [shape = 's32[]', space=sflag, size = 0x4, offset = 0, fixed_abs, tag = 'sflag constant byte address 0x0 - dummy sync flag']
  #allocation29 [shape = 's32[]', space=sflag, size = 0x4, offset = 0, fixed_abs, tag = 'sflag constant byte address 0x0 - dummy sync flag']
  #allocation30 [shape = 's32[]', space=sflag, size = 0x4, offset = 0, fixed_abs, tag = 'sflag constant byte address 0x0 - dummy sync flag']
  #allocation31 [shape = 's32[]', space=sflag, size = 0x4, offset = 0, fixed_abs, tag = 'sflag constant byte address 0x0 - dummy sync flag']
  #allocation32 [shape = 's32[]', space=sflag, size = 0x4, offset = 0, fixed_abs, tag = 'sflag constant byte address 0x0 - dummy sync flag']
  #allocation33 [shape = 's32[]', space=sflag, size = 0x4, offset = 0, fixed_abs, tag = 'sflag constant byte address 0x0 - dummy sync flag']
  #allocation34 [shape = 's32[]', space=sflag, size = 0x4, offset = 0, fixed_abs, tag = 'sflag constant byte address 0x0 - dummy sync flag']
  #allocation35 [shape = 's32[]', space=sflag, size = 0x4, offset = 0, fixed_abs, tag = 'sflag constant byte address 0x0 - dummy sync flag']
  #allocation36 [shape = 's32[]', space=sflag, size = 0x4, offset = 0, fixed_abs, tag = 'sflag constant byte address 0x0 - dummy sync flag']
  #allocation37 [shape = 's32[]', space=sflag, size = 0x4, offset = 0, fixed_abs, tag = 'sflag constant byte address 0x0 - dummy sync flag']
  #allocation38 [shape = 's32[]', space=sflag, size = 0x4, offset = 0, fixed_abs, tag = 'sflag constant byte address 0x0 - dummy sync flag']
  #allocation39 [shape = 's32[]', space=sflag, size = 0x4, offset = 0, fixed_abs, tag = 'sflag constant byte address 0x0 - dummy sync flag']
  #allocation40 [shape = 's32[]', space=sflag, size = 0x4, offset = 0, fixed_abs, tag = 'sflag constant byte address 0x0 - dummy sync flag']
  #allocation41 [shape = 's32[]', space=sflag, size = 0x4, offset = 0, fixed_abs, tag = 'sflag constant byte address 0x0 - dummy sync flag']
  #allocation42 [shape = 's32[]', space=sflag, size = 0x4, offset = 0, fixed_abs, tag = 'sflag constant byte address 0x0 - dummy sync flag']
  #allocation43 [shape = 's32[]', space=sflag, size = 0x4, offset = 0, fixed_abs, tag = 'sflag constant byte address 0x0 - dummy sync flag']
  #allocation44 [shape = 's32[]', space=sflag, size = 0x4, offset = 0, fixed_abs, tag = 'sflag constant byte address 0x0 - dummy sync flag']
  #allocation45 [shape = 's32[]', space=sflag, size = 0x4, offset = 0, fixed_abs, tag = 'sflag constant byte address 0x0 - dummy sync flag']
  #allocation46 [shape = 's32[]', space=sflag, size = 0x4, offset = 0, fixed_abs, tag = 'sflag constant byte address 0x0 - dummy sync flag']
  %s0 = inlined_call_operand.hbm [shape: s32[32], index: 0, kind: input, shape index: {}]
  %s1 = inlined_call_operand.hbm [shape: f32[128,128], index: 1, kind: input, shape index: {}]
  %s2 = inlined_call_operand.hbm [shape: bf16[2,384,128], index: 2, kind: input, shape index: {}]
  %s3 = inlined_call_operand.vmem [shape: f32[2,1,128], index: 3, kind: input, shape index: {}]
  %s4 = inlined_call_operand.vmem [shape: f32[2,1,128], index: 4, kind: input, shape index: {}]
  %s5 = inlined_call_operand.vmem [shape: f32[2,1,128], index: 5, kind: input, shape index: {}]
  %s6 = inlined_call_operand.hbm [shape: bf16[128,128], index: 6, kind: input, shape index: {}]
  %s7 = inlined_call_operand.vmem [shape: f32[1,128], index: 7, kind: input, shape index: {}]
  %s8 = inlined_call_operand.hbm [shape: f32[32,128], index: 8, kind: output, shape index: {}]
  %s9 = sld [smem:[#allocation0]]
  $region129: #{tpu_custom_call.1} parent=0
    _
  %s11 = ssub.s32 1, %s9
  %s12 = scalar_select 0, %s11, %s9
  %14 = dma.hbm_to_smem %s0, 16, [#allocation6], [#allocation5]
  %15 = dma.done [#allocation5], 16
  %16 = sfence
  $region1: #{tpu_custom_call.1} parent=0
    #allocation7 [shape = 'u8[196608]{0}', space=vmem, size = 0x30000, scoped, tag = 'input window, operand 2, single buffered']
    #allocation8 [shape = 's32[2]{0}', space=sflag, size = 0x8, scoped, tag = 'scoped memory for tpu_custom_call.1']
    #allocation9 [shape = 's32[2]{0}', space=sflag, size = 0x8, scoped, tag = 'scoped memory for tpu_custom_call.1']
    #allocation10 [shape = 'u8[32768]{0}', space=vmem, size = 0x8000, scoped, tag = 'input window, operand 6, single buffered']
    #allocation11 [shape = 's32[1]{0}', space=sflag, size = 0x4, scoped, tag = 'scoped memory for tpu_custom_call.1']
    #allocation12 [shape = 'u8[16384]{0}', space=vmem, size = 0x4000, scoped, tag = 'output window, operand 0']
    %17 = vsyncpa [#allocation8], 0
    %18 = vsyncpa [#allocation11], 0
    %19 = vsyncpa [#allocation9], 0
    %s20 = scalar_lea.sflag [#allocation9], 1
    %21 = vsyncpa %s20, 0
    loop: start=0, step=1, limit=4
    $region2: #{tpu_custom_call.1} parent=1 // loop_pre_header
      _
    $region3: #{tpu_custom_call.1} parent=1 // loop_header
      %s23 = sphi 0, %s27
      %p24 = scmp.ge.s32.totalorder %s23, 4
      %s31 = sphi 0, %s31
      %s33 = sphi 0, %s31
      %s34 = sphi 0, %s33
      %s48 = sphi 0, %s34
      %s52 = sphi 0, %s52
      %s54 = sphi 0, %s52
      %s55 = sphi 0, %s54
      %s69 = sphi 0, %s55
      %s73 = sphi 0, %s73
      %s75 = sphi 0, %s73
      %s76 = sphi 0, %s75
      %s90 = sphi 0, %s76
      %s94 = sphi 0, %s94
      %s96 = sphi 0, %s94
      %s97 = sphi 0, %s96
      %s111 = sphi 0, %s97
      %s115 = sphi 0, %s115
      %s117 = sphi 0, %s115
      %s118 = sphi 0, %s117
      %s132 = sphi 0, %s118
      %s136 = sphi 0, %s136
      %s138 = sphi 0, %s136
      %s139 = sphi 0, %s138
      %s153 = sphi 0, %s139
      %s159 = sphi 0, %s161
      %s162 = sphi 0, %s159
      %s163 = sphi 0, %s162
      %s179 = sphi 0, %s163
    $region4: #{tpu_custom_call.1} parent=1 // loop_header_branch
      %26 = sbr.rel (%p24) target = $region8
    $region5: #{tpu_custom_call.1} parent=1 // loop_body
      %s28 = ssub.s32 %s23, 1
      %s29 = ssub.s32 %s23, 2
      %s30 = sadd.s32 %s23, 1
      %s32 = sadd.s32 %s31, 1
      %p35 = scmp.eq.s32.totalorder %s23, 1
      %p36 = scmp.ne.s32.totalorder %s31, %s33
      %p37 = scmp.eq.s32.totalorder %s23, 0
      %p38 = por %p36, %p37
      %p39 = scmp.ne.s32.totalorder %s31, %s33
      %p40 = scmp.eq.s32.totalorder %s28, 1
      %p41 = por %p39, %p40
      %p42 = scmp.ne.s32.totalorder %s33, %s34
      %p43 = scmp.eq.s32.totalorder %s28, 0
      %p44 = por %p42, %p43
      %p45 = scmp.ne.s32.totalorder %s33, %s34
      %p46 = scmp.eq.s32.totalorder %s29, 1
      %p47 = por %p45, %p46
      %p49 = scmp.ne.s32.totalorder %s34, %s48
      %p50 = scmp.eq.s32.totalorder %s29, 0
      %p51 = por %p49, %p50
      %s53 = sadd.s32 %s52, 1
      %p56 = scmp.eq.s32.totalorder %s23, 1
      %p57 = scmp.ne.s32.totalorder %s52, %s54
      %p58 = scmp.eq.s32.totalorder %s23, 0
      %p59 = por %p57, %p58
      %p60 = scmp.ne.s32.totalorder %s52, %s54
      %p61 = scmp.eq.s32.totalorder %s28, 1
      %p62 = por %p60, %p61
      %p63 = scmp.ne.s32.totalorder %s54, %s55
      %p64 = scmp.eq.s32.totalorder %s28, 0
      %p65 = por %p63, %p64
      %p66 = scmp.ne.s32.totalorder %s54, %s55
      %p67 = scmp.eq.s32.totalorder %s29, 1
      %p68 = por %p66, %p67
      %p70 = scmp.ne.s32.totalorder %s55, %s69
      %p71 = scmp.eq.s32.totalorder %s29, 0
      %p72 = por %p70, %p71
      %s74 = sadd.s32 %s73, 1
      %p77 = scmp.eq.s32.totalorder %s23, 1
      %p78 = scmp.ne.s32.totalorder %s73, %s75
      %p79 = scmp.eq.s32.totalorder %s23, 0
      %p80 = por %p78, %p79
      %p81 = scmp.ne.s32.totalorder %s73, %s75
      %p82 = scmp.eq.s32.totalorder %s28, 1
      %p83 = por %p81, %p82
      %p84 = scmp.ne.s32.totalorder %s75, %s76
      %p85 = scmp.eq.s32.totalorder %s28, 0
      %p86 = por %p84, %p85
      %p87 = scmp.ne.s32.totalorder %s75, %s76
      %p88 = scmp.eq.s32.totalorder %s29, 1
      %p89 = por %p87, %p88
      %p91 = scmp.ne.s32.totalorder %s76, %s90
      %p92 = scmp.eq.s32.totalorder %s29, 0
      %p93 = por %p91, %p92
      %s95 = sadd.s32 %s94, 1
      %p98 = scmp.eq.s32.totalorder %s23, 1
      %p99 = scmp.ne.s32.totalorder %s94, %s96
      %p100 = scmp.eq.s32.totalorder %s23, 0
      %p101 = por %p99, %p100
      %p102 = scmp.ne.s32.totalorder %s94, %s96
      %p103 = scmp.eq.s32.totalorder %s28, 1
      %p104 = por %p102, %p103
      %p105 = scmp.ne.s32.totalorder %s96, %s97
      %p106 = scmp.eq.s32.totalorder %s28, 0
      %p107 = por %p105, %p106
      %p108 = scmp.ne.s32.totalorder %s96, %s97
      %p109 = scmp.eq.s32.totalorder %s29, 1
      %p110 = por %p108, %p109
      %p112 = scmp.ne.s32.totalorder %s97, %s111
      %p113 = scmp.eq.s32.totalorder %s29, 0
      %p114 = por %p112, %p113
      %s116 = sadd.s32 %s115, 1
      %p119 = scmp.eq.s32.totalorder %s23, 1
      %p120 = scmp.ne.s32.totalorder %s115, %s117
      %p121 = scmp.eq.s32.totalorder %s23, 0
      %p122 = por %p120, %p121
      %p123 = scmp.ne.s32.totalorder %s115, %s117
      %p124 = scmp.eq.s32.totalorder %s28, 1
      %p125 = por %p123, %p124
      %p126 = scmp.ne.s32.totalorder %s117, %s118
      %p127 = scmp.eq.s32.totalorder %s28, 0
      %p128 = por %p126, %p127
      %p129 = scmp.ne.s32.totalorder %s117, %s118
      %p130 = scmp.eq.s32.totalorder %s29, 1
      %p131 = por %p129, %p130
      %p133 = scmp.ne.s32.totalorder %s118, %s132
      %p134 = scmp.eq.s32.totalorder %s29, 0
      %p135 = por %p133, %p134
      %s137 = sadd.s32 %s136, 1
      %p140 = scmp.eq.s32.totalorder %s23, 1
      %p141 = scmp.ne.s32.totalorder %s136, %s138
      %p142 = scmp.eq.s32.totalorder %s23, 0
      %p143 = por %p141, %p142
      %p144 = scmp.ne.s32.totalorder %s136, %s138
      %p145 = scmp.eq.s32.totalorder %s28, 1
      %p146 = por %p144, %p145
      %p147 = scmp.ne.s32.totalorder %s138, %s139
      %p148 = scmp.eq.s32.totalorder %s28, 0
      %p149 = por %p147, %p148
      %p150 = scmp.ne.s32.totalorder %s138, %s139
      %p151 = scmp.eq.s32.totalorder %s29, 1
      %p152 = por %p150, %p151
      %p154 = scmp.ne.s32.totalorder %s139, %s153
      %p155 = scmp.eq.s32.totalorder %s29, 0
      %p156 = por %p154, %p155
      %s157 = ssub.s32 %s23, %s30
      %p158 = scmp.eq.s32.totalorder %s157, 0
      %s160 = sadd.s32 %s159, 1
      %s161 = scalar_select %p158, %s159, %s160
      %p164 = pneg %p158
      %p165 = scmp.eq.s32.totalorder %s23, 1
      %p166 = por %p164, %p165
      %p167 = scmp.ne.s32.totalorder %s159, %s162
      %p168 = scmp.eq.s32.totalorder %s23, 0
      %p169 = por %p167, %p168
      %p170 = scmp.ne.s32.totalorder %s159, %s162
      %p171 = scmp.eq.s32.totalorder %s28, 1
      %p172 = por %p170, %p171
      %p173 = scmp.ne.s32.totalorder %s162, %s163
      %p174 = scmp.eq.s32.totalorder %s28, 0
      %p175 = por %p173, %p174
      %p176 = scmp.ne.s32.totalorder %s162, %s163
      %p177 = scmp.eq.s32.totalorder %s29, 1
      %p178 = por %p176, %p177
      %p180 = scmp.ne.s32.totalorder %s163, %s179
      %p181 = scmp.eq.s32.totalorder %s29, 0
      %p182 = por %p180, %p181
      %p183 = scmp.le.s32.totalorder 1, %s23
      %p184 = scmp.lt.s32.totalorder %s23, 3
      %p185 = pnand %p183, %p184
      %p186 = pneg %p185
      // Predicated region
      $region9: #{tpu_custom_call.1} parent=5 // pred_check
        _
      $region10: #{tpu_custom_call.1} parent=5 // pred_check_branch
        %188 = sbr.rel (%p185) target = $region12
      $region11: #{tpu_custom_call.1} parent=5 // pred_region
        %s189 = ssub.s32 %s23, 1
        // Predicated region
        $region13: #{tpu_custom_call.1} parent=11 // pred_check
          %p190 = pneg %p44
        $region14: #{tpu_custom_call.1} parent=11 // pred_check_branch
          %192 = sbr.rel (%p190) target = $region16
        $region15: #{tpu_custom_call.1} parent=11 // pred_region
          %s194 = ssub.s32 6144, 6144
          %195 = vsyncadd [#allocation8], %s194
          %s196 = sshll.u32 [#allocation7], 4
          %s197 = int_to_ptr.vmem [resolvable:$true] %s196
          %202 = dma.hbm_to_vmem [thread:$0]  %s2, 6144, %s197, [#allocation8], 64, 64, 4
        $region16: #{tpu_custom_call.1} parent=11 // pred_fallthru
          _
        // Predicated region
        $region17: #{tpu_custom_call.1} parent=11 // pred_check
          %p203 = pneg %p65
        $region18: #{tpu_custom_call.1} parent=11 // pred_check_branch
          %205 = sbr.rel (%p203) target = $region20
        $region19: #{tpu_custom_call.1} parent=11 // pred_region
          _
        $region20: #{tpu_custom_call.1} parent=11 // pred_fallthru
          _
        // Predicated region
        $region21: #{tpu_custom_call.1} parent=11 // pred_check
          %p206 = pneg %p86
        $region22: #{tpu_custom_call.1} parent=11 // pred_check_branch
          %208 = sbr.rel (%p206) target = $region24
        $region23: #{tpu_custom_call.1} parent=11 // pred_region
          _
        $region24: #{tpu_custom_call.1} parent=11 // pred_fallthru
          _
        // Predicated region
        $region25: #{tpu_custom_call.1} parent=11 // pred_check
          %p209 = pneg %p107
        $region26: #{tpu_custom_call.1} parent=11 // pred_check_branch
          %211 = sbr.rel (%p209) target = $region28
        $region27: #{tpu_custom_call.1} parent=11 // pred_region
          _
        $region28: #{tpu_custom_call.1} parent=11 // pred_fallthru
          _
        // Predicated region
        $region29: #{tpu_custom_call.1} parent=11 // pred_check
          %p212 = pneg %p128
        $region30: #{tpu_custom_call.1} parent=11 // pred_check_branch
          %214 = sbr.rel (%p212) target = $region32
        $region31: #{tpu_custom_call.1} parent=11 // pred_region
          %s216 = ssub.s32 1024, 1024
          %217 = vsyncadd [#allocation11], %s216
          %s218 = sshll.u32 [#allocation10], 4
          %s219 = int_to_ptr.vmem [resolvable:$true] %s218
          %224 = dma.hbm_to_vmem [thread:$0]  %s6, 1024, %s219, [#allocation11], 64, 64, 4
        $region32: #{tpu_custom_call.1} parent=11 // pred_fallthru
          _
        // Predicated region
        $region33: #{tpu_custom_call.1} parent=11 // pred_check
          %p225 = pneg %p149
        $region34: #{tpu_custom_call.1} parent=11 // pred_check_branch
          %227 = sbr.rel (%p225) target = $region36
        $region35: #{tpu_custom_call.1} parent=11 // pred_region
          _
        $region36: #{tpu_custom_call.1} parent=11 // pred_fallthru
          _
      $region12: #{tpu_custom_call.1} parent=5 // pred_fallthru
        _
      %p228 = scmp.lt.s32.totalorder %s23, 2
      // Predicated region
      $region37: #{tpu_custom_call.1} parent=5 // pred_check
        %p229 = pneg %p228
      $region38: #{tpu_custom_call.1} parent=5 // pred_check_branch
        %231 = sbr.rel (%p229) target = $region40
      $region39: #{tpu_custom_call.1} parent=5 // pred_region
        _
      $region40: #{tpu_custom_call.1} parent=5 // pred_fallthru
        _
      %p232 = scmp.le.s32.totalorder 1, %s23
      %p233 = scmp.lt.s32.totalorder %s23, 3
      %p234 = pnand %p232, %p233
      %p235 = pneg %p234
      // Predicated region
      $region41: #{tpu_custom_call.1} parent=5 // pred_check
        _
      $region42: #{tpu_custom_call.1} parent=5 // pred_check_branch
        %237 = sbr.rel (%p234) target = $region44
      $region43: #{tpu_custom_call.1} parent=5 // pred_region
        %s238 = ssub.s32 %s23, 1
        // Predicated region
        $region45: #{tpu_custom_call.1} parent=43 // pred_check
          %p239 = pneg %p44
        $region46: #{tpu_custom_call.1} parent=43 // pred_check_branch
          %241 = sbr.rel (%p239) target = $region48
        $region47: #{tpu_custom_call.1} parent=43 // pred_region
          %242 = dma.done [#allocation8], 6144
        $region48: #{tpu_custom_call.1} parent=43 // pred_fallthru
          _
        // Predicated region
        $region49: #{tpu_custom_call.1} parent=43 // pred_check
          %p243 = pneg %p128
        $region50: #{tpu_custom_call.1} parent=43 // pred_check_branch
          %245 = sbr.rel (%p243) target = $region52
        $region51: #{tpu_custom_call.1} parent=43 // pred_region
          %246 = dma.done [#allocation11], 1024
        $region52: #{tpu_custom_call.1} parent=43 // pred_fallthru
          _
        %p247 = pneg %p44
        %p248 = pneg %p41
        %p249 = pneg %p65
        %p250 = pneg %p62
        %p251 = pneg %p86
        %p252 = pneg %p83
        %p253 = pneg %p107
        %p254 = pneg %p104
        %p255 = pneg %p128
        %p256 = pneg %p125
        %p257 = pneg %p149
        %p258 = pneg %p146
        %p259 = pneg %p175
        %p260 = pneg %p172
        %s261 = sand.u32 %s162, 1
        %s262 = scalar_lea.sflag [#allocation9], %s261
        %s263 = sand.u32 %s162, 1
        %s264 = smul.addr %s263, 16
        %s265 = scalar_lea.vmem [#allocation12], %s264
        %s266 = smul.u32 2, %s28
        %s268 = smul.u32 %s28, 16
        %s269 = sld [smem:[#allocation6 + %s268]]
        %p270 = scmp.gt.s32.totalorder %s269, 0
        %s271 = scalar_select %p270, %s269, 0
        %p272 = scmp.lt.s32.totalorder %s271, 63
        %s273 = scalar_select %p272, %s271, 63
        %s274 = smul.addr %s273, 16
        %s275 = scalar_lea.hbm %s1, %s274
        // Predicated region
        $region53: #{tpu_custom_call.1} parent=43 // pred_check
          _
        $region54: #{tpu_custom_call.1} parent=43 // pred_check_branch
          %277 = sbr.rel target = $region56
        $region55: #{tpu_custom_call.1} parent=43 // pred_region
          %278 = sst [smem:[#allocation15]] [#allocation14]
          %279 = sst [smem:[#allocation16]] [#allocation13]
        $region56: #{tpu_custom_call.1} parent=43 // pred_fallthru
          _
        %281 = shalt.err (0)
        %s283 = sshll.u32 [#allocation2], 4
        %s284 = int_to_ptr.vmem [resolvable:$true] %s283
        %286 = dma.hbm_to_vmem [thread:$0]  %s275, 16, %s284, [#allocation4]
        %s287 = sadd.s32 %s268, 1
        %s288 = sld [smem:[#allocation6 + %s287]]
        %p289 = scmp.gt.s32.totalorder %s288, 0
        %s290 = scalar_select %p289, %s288, 0
        %p291 = scmp.lt.s32.totalorder %s290, 63
        %s292 = scalar_select %p291, %s290, 63
        %s293 = smul.addr %s292, 16
        %s294 = scalar_lea.hbm %s1, %s293
        %s295 = scalar_lea.vmem [#allocation2], 1
        // Predicated region
        $region57: #{tpu_custom_call.1} parent=43 // pred_check
          _
        $region58: #{tpu_custom_call.1} parent=43 // pred_check_branch
          %297 = sbr.rel target = $region60
        $region59: #{tpu_custom_call.1} parent=43 // pred_region
          %298 = sst [smem:[#allocation15]] [#allocation18]
          %299 = sst [smem:[#allocation16]] [#allocation17]
        $region60: #{tpu_custom_call.1} parent=43 // pred_fallthru
          _
        %301 = shalt.err (0)
        %s303 = sshll.u32 %s295, 4
        %s304 = int_to_ptr.vmem [resolvable:$true] %s303
        %306 = dma.hbm_to_vmem [thread:$0]  %s294, 16, %s304, [#allocation4]
        %s307 = sadd.s32 %s268, 2
        %s308 = sld [smem:[#allocation6 + %s307]]
        %p309 = scmp.gt.s32.totalorder %s308, 0
        %s310 = scalar_select %p309, %s308, 0
        %p311 = scmp.lt.s32.totalorder %s310, 63
        %s312 = scalar_select %p311, %s310, 63
        %s313 = smul.addr %s312, 16
        %s314 = scalar_lea.hbm %s1, %s313
        %s315 = scalar_lea.vmem [#allocation2], 2
        // Predicated region
        $region61: #{tpu_custom_call.1} parent=43 // pred_check
          _
        $region62: #{tpu_custom_call.1} parent=43 // pred_check_branch
          %317 = sbr.rel target = $region64
        $region63: #{tpu_custom_call.1} parent=43 // pred_region
          %318 = sst [smem:[#allocation15]] [#allocation20]
          %319 = sst [smem:[#allocation16]] [#allocation19]
        $region64: #{tpu_custom_call.1} parent=43 // pred_fallthru
          _
        %321 = shalt.err (0)
        %s323 = sshll.u32 %s315, 4
        %s324 = int_to_ptr.vmem [resolvable:$true] %s323
        %326 = dma.hbm_to_vmem [thread:$0]  %s314, 16, %s324, [#allocation4]
        %s327 = sadd.s32 %s268, 3
        %s328 = sld [smem:[#allocation6 + %s327]]
        %p329 = scmp.gt.s32.totalorder %s328, 0
        %s330 = scalar_select %p329, %s328, 0
        %p331 = scmp.lt.s32.totalorder %s330, 63
        %s332 = scalar_select %p331, %s330, 63
        %s333 = smul.addr %s332, 16
        %s334 = scalar_lea.hbm %s1, %s333
        %s335 = scalar_lea.vmem [#allocation2], 3
        // Predicated region
        $region65: #{tpu_custom_call.1} parent=43 // pred_check
          _
        $region66: #{tpu_custom_call.1} parent=43 // pred_check_branch
          %337 = sbr.rel target = $region68
        $region67: #{tpu_custom_call.1} parent=43 // pred_region
          %338 = sst [smem:[#allocation15]] [#allocation22]
          %339 = sst [smem:[#allocation16]] [#allocation21]
        $region68: #{tpu_custom_call.1} parent=43 // pred_fallthru
          _
        %341 = shalt.err (0)
        %s343 = sshll.u32 %s335, 4
        %s344 = int_to_ptr.vmem [resolvable:$true] %s343
        %346 = dma.hbm_to_vmem [thread:$0]  %s334, 16, %s344, [#allocation4]
        %s347 = sadd.s32 %s268, 4
        %s348 = sld [smem:[#allocation6 + %s347]]
        %p349 = scmp.gt.s32.totalorder %s348, 0
        %s350 = scalar_select %p349, %s348, 0
        %p351 = scmp.lt.s32.totalorder %s350, 63
        %s352 = scalar_select %p351, %s350, 63
        %s353 = smul.addr %s352, 16
        %s354 = scalar_lea.hbm %s1, %s353
        %s355 = scalar_lea.vmem [#allocation2], 4
        // Predicated region
        $region69: #{tpu_custom_call.1} parent=43 // pred_check
          _
        $region70: #{tpu_custom_call.1} parent=43 // pred_check_branch
          %357 = sbr.rel target = $region72
        $region71: #{tpu_custom_call.1} parent=43 // pred_region
          %358 = sst [smem:[#allocation15]] [#allocation24]
          %359 = sst [smem:[#allocation16]] [#allocation23]
        $region72: #{tpu_custom_call.1} parent=43 // pred_fallthru
          _
        %361 = shalt.err (0)
        %s363 = sshll.u32 %s355, 4
        %s364 = int_to_ptr.vmem [resolvable:$true] %s363
        %366 = dma.hbm_to_vmem [thread:$0]  %s354, 16, %s364, [#allocation4]
        %s367 = sadd.s32 %s268, 5
        %s368 = sld [smem:[#allocation6 + %s367]]
        %p369 = scmp.gt.s32.totalorder %s368, 0
        %s370 = scalar_select %p369, %s368, 0
        %p371 = scmp.lt.s32.totalorder %s370, 63
        %s372 = scalar_select %p371, %s370, 63
        %s373 = smul.addr %s372, 16
        %s374 = scalar_lea.hbm %s1, %s373
        %s375 = scalar_lea.vmem [#allocation2], 5
        // Predicated region
        $region73: #{tpu_custom_call.1} parent=43 // pred_check
          _
        $region74: #{tpu_custom_call.1} parent=43 // pred_check_branch
          %377 = sbr.rel target = $region76
        $region75: #{tpu_custom_call.1} parent=43 // pred_region
          %378 = sst [smem:[#allocation15]] [#allocation26]
          %379 = sst [smem:[#allocation16]] [#allocation25]
        $region76: #{tpu_custom_call.1} parent=43 // pred_fallthru
          _
        %381 = shalt.err (0)
        %s383 = sshll.u32 %s375, 4
        %s384 = int_to_ptr.vmem [resolvable:$true] %s383
        %386 = dma.hbm_to_vmem [thread:$0]  %s374, 16, %s384, [#allocation4]
        %s387 = sadd.s32 %s268, 6
        %s388 = sld [smem:[#allocation6 + %s387]]
        %p389 = scmp.gt.s32.totalorder %s388, 0
        %s390 = scalar_select %p389, %s388, 0
        %p391 = scmp.lt.s32.totalorder %s390, 63
        %s392 = scalar_select %p391, %s390, 63
        %s393 = smul.addr %s392, 16
        %s394 = scalar_lea.hbm %s1, %s393
        %s395 = scalar_lea.vmem [#allocation2], 6
        // Predicated region
        $region77: #{tpu_custom_call.1} parent=43 // pred_check
          _
        $region78: #{tpu_custom_call.1} parent=43 // pred_check_branch
          %397 = sbr.rel target = $region80
        $region79: #{tpu_custom_call.1} parent=43 // pred_region
          %398 = sst [smem:[#allocation15]] [#allocation28]
          %399 = sst [smem:[#allocation16]] [#allocation27]
        $region80: #{tpu_custom_call.1} parent=43 // pred_fallthru
          _
        %401 = shalt.err (0)
        %s403 = sshll.u32 %s395, 4
        %s404 = int_to_ptr.vmem [resolvable:$true] %s403
        %406 = dma.hbm_to_vmem [thread:$0]  %s394, 16, %s404, [#allocation4]
        %s407 = sadd.s32 %s268, 7
        %s408 = sld [smem:[#allocation6 + %s407]]
        %p409 = scmp.gt.s32.totalorder %s408, 0
        %s410 = scalar_select %p409, %s408, 0
        %p411 = scmp.lt.s32.totalorder %s410, 63
        %s412 = scalar_select %p411, %s410, 63
        %s413 = smul.addr %s412, 16
        %s414 = scalar_lea.hbm %s1, %s413
        %s415 = scalar_lea.vmem [#allocation2], 7
        // Predicated region
        $region81: #{tpu_custom_call.1} parent=43 // pred_check
          _
        $region82: #{tpu_custom_call.1} parent=43 // pred_check_branch
          %417 = sbr.rel target = $region84
        $region83: #{tpu_custom_call.1} parent=43 // pred_region
          %418 = sst [smem:[#allocation15]] [#allocation30]
          %419 = sst [smem:[#allocation16]] [#allocation29]
        $region84: #{tpu_custom_call.1} parent=43 // pred_fallthru
          _
        %421 = shalt.err (0)
        %s423 = sshll.u32 %s415, 4
        %s424 = int_to_ptr.vmem [resolvable:$true] %s423
        %426 = dma.hbm_to_vmem [thread:$0]  %s414, 16, %s424, [#allocation4]
        %s427 = sadd.s32 %s268, 8
        %s428 = sld [smem:[#allocation6 + %s427]]
        %p429 = scmp.gt.s32.totalorder %s428, 0
        %s430 = scalar_select %p429, %s428, 0
        %p431 = scmp.lt.s32.totalorder %s430, 63
        %s432 = scalar_select %p431, %s430, 63
        %s433 = smul.addr %s432, 16
        %s434 = scalar_lea.hbm %s1, %s433
        %s435 = scalar_lea.vmem [#allocation2], 8
        // Predicated region
        $region85: #{tpu_custom_call.1} parent=43 // pred_check
          _
        $region86: #{tpu_custom_call.1} parent=43 // pred_check_branch
          %437 = sbr.rel target = $region88
        $region87: #{tpu_custom_call.1} parent=43 // pred_region
          %438 = sst [smem:[#allocation15]] [#allocation32]
          %439 = sst [smem:[#allocation16]] [#allocation31]
        $region88: #{tpu_custom_call.1} parent=43 // pred_fallthru
          _
        %441 = shalt.err (0)
        %s443 = sshll.u32 %s435, 4
        %s444 = int_to_ptr.vmem [resolvable:$true] %s443
        %446 = dma.hbm_to_vmem [thread:$0]  %s434, 16, %s444, [#allocation4]
        %s447 = sadd.s32 %s268, 9
        %s448 = sld [smem:[#allocation6 + %s447]]
        %p449 = scmp.gt.s32.totalorder %s448, 0
        %s450 = scalar_select %p449, %s448, 0
        %p451 = scmp.lt.s32.totalorder %s450, 63
        %s452 = scalar_select %p451, %s450, 63
        %s453 = smul.addr %s452, 16
        %s454 = scalar_lea.hbm %s1, %s453
        %s455 = scalar_lea.vmem [#allocation2], 9
        // Predicated region
        $region89: #{tpu_custom_call.1} parent=43 // pred_check
          _
        $region90: #{tpu_custom_call.1} parent=43 // pred_check_branch
          %457 = sbr.rel target = $region92
        $region91: #{tpu_custom_call.1} parent=43 // pred_region
          %458 = sst [smem:[#allocation15]] [#allocation34]
          %459 = sst [smem:[#allocation16]] [#allocation33]
        $region92: #{tpu_custom_call.1} parent=43 // pred_fallthru
          _
        %461 = shalt.err (0)
        %s463 = sshll.u32 %s455, 4
        %s464 = int_to_ptr.vmem [resolvable:$true] %s463
        %466 = dma.hbm_to_vmem [thread:$0]  %s454, 16, %s464, [#allocation4]
        %s467 = sadd.s32 %s268, 10
        %s468 = sld [smem:[#allocation6 + %s467]]
        %p469 = scmp.gt.s32.totalorder %s468, 0
        %s470 = scalar_select %p469, %s468, 0
        %p471 = scmp.lt.s32.totalorder %s470, 63
        %s472 = scalar_select %p471, %s470, 63
        %s473 = smul.addr %s472, 16
        %s474 = scalar_lea.hbm %s1, %s473
        %s475 = scalar_lea.vmem [#allocation2], 10
        // Predicated region
        $region93: #{tpu_custom_call.1} parent=43 // pred_check
          _
        $region94: #{tpu_custom_call.1} parent=43 // pred_check_branch
          %477 = sbr.rel target = $region96
        $region95: #{tpu_custom_call.1} parent=43 // pred_region
          %478 = sst [smem:[#allocation15]] [#allocation36]
          %479 = sst [smem:[#allocation16]] [#allocation35]
        $region96: #{tpu_custom_call.1} parent=43 // pred_fallthru
          _
        %481 = shalt.err (0)
        %s483 = sshll.u32 %s475, 4
        %s484 = int_to_ptr.vmem [resolvable:$true] %s483
        %486 = dma.hbm_to_vmem [thread:$0]  %s474, 16, %s484, [#allocation4]
        %s487 = sadd.s32 %s268, 11
        %s488 = sld [smem:[#allocation6 + %s487]]
        %p489 = scmp.gt.s32.totalorder %s488, 0
        %s490 = scalar_select %p489, %s488, 0
        %p491 = scmp.lt.s32.totalorder %s490, 63
        %s492 = scalar_select %p491, %s490, 63
        %s493 = smul.addr %s492, 16
        %s494 = scalar_lea.hbm %s1, %s493
        %s495 = scalar_lea.vmem [#allocation2], 11
        // Predicated region
        $region97: #{tpu_custom_call.1} parent=43 // pred_check
          _
        $region98: #{tpu_custom_call.1} parent=43 // pred_check_branch
          %497 = sbr.rel target = $region100
        $region99: #{tpu_custom_call.1} parent=43 // pred_region
          %498 = sst [smem:[#allocation15]] [#allocation38]
          %499 = sst [smem:[#allocation16]] [#allocation37]
        $region100: #{tpu_custom_call.1} parent=43 // pred_fallthru
          _
        %501 = shalt.err (0)
        %s503 = sshll.u32 %s495, 4
        %s504 = int_to_ptr.vmem [resolvable:$true] %s503
        %506 = dma.hbm_to_vmem [thread:$0]  %s494, 16, %s504, [#allocation4]
        %s507 = sadd.s32 %s268, 12
        %s508 = sld [smem:[#allocation6 + %s507]]
        %p509 = scmp.gt.s32.totalorder %s508, 0
        %s510 = scalar_select %p509, %s508, 0
        %p511 = scmp.lt.s32.totalorder %s510, 63
        %s512 = scalar_select %p511, %s510, 63
        %s513 = smul.addr %s512, 16
        %s514 = scalar_lea.hbm %s1, %s513
        %s515 = scalar_lea.vmem [#allocation2], 12
        // Predicated region
        $region101: #{tpu_custom_call.1} parent=43 // pred_check
          _
        $region102: #{tpu_custom_call.1} parent=43 // pred_check_branch
          %517 = sbr.rel target = $region104
        $region103: #{tpu_custom_call.1} parent=43 // pred_region
          %518 = sst [smem:[#allocation15]] [#allocation40]
          %519 = sst [smem:[#allocation16]] [#allocation39]
        $region104: #{tpu_custom_call.1} parent=43 // pred_fallthru
          _
        %521 = shalt.err (0)
        %s523 = sshll.u32 %s515, 4
        %s524 = int_to_ptr.vmem [resolvable:$true] %s523
        %526 = dma.hbm_to_vmem [thread:$0]  %s514, 16, %s524, [#allocation4]
        %s527 = sadd.s32 %s268, 13
        %s528 = sld [smem:[#allocation6 + %s527]]
        %p529 = scmp.gt.s32.totalorder %s528, 0
        %s530 = scalar_select %p529, %s528, 0
        %p531 = scmp.lt.s32.totalorder %s530, 63
        %s532 = scalar_select %p531, %s530, 63
        %s533 = smul.addr %s532, 16
        %s534 = scalar_lea.hbm %s1, %s533
        %s535 = scalar_lea.vmem [#allocation2], 13
        // Predicated region
        $region105: #{tpu_custom_call.1} parent=43 // pred_check
          _
        $region106: #{tpu_custom_call.1} parent=43 // pred_check_branch
          %537 = sbr.rel target = $region108
        $region107: #{tpu_custom_call.1} parent=43 // pred_region
          %538 = sst [smem:[#allocation15]] [#allocation42]
          %539 = sst [smem:[#allocation16]] [#allocation41]
        $region108: #{tpu_custom_call.1} parent=43 // pred_fallthru
          _
        %541 = shalt.err (0)
        %s543 = sshll.u32 %s535, 4
        %s544 = int_to_ptr.vmem [resolvable:$true] %s543
        %546 = dma.hbm_to_vmem [thread:$0]  %s534, 16, %s544, [#allocation4]
        %s547 = sadd.s32 %s268, 14
        %s548 = sld [smem:[#allocation6 + %s547]]
        %p549 = scmp.gt.s32.totalorder %s548, 0
        %s550 = scalar_select %p549, %s548, 0
        %p551 = scmp.lt.s32.totalorder %s550, 63
        %s552 = scalar_select %p551, %s550, 63
        %s553 = smul.addr %s552, 16
        %s554 = scalar_lea.hbm %s1, %s553
        %s555 = scalar_lea.vmem [#allocation2], 14
        // Predicated region
        $region109: #{tpu_custom_call.1} parent=43 // pred_check
          _
        $region110: #{tpu_custom_call.1} parent=43 // pred_check_branch
          %557 = sbr.rel target = $region112
        $region111: #{tpu_custom_call.1} parent=43 // pred_region
          %558 = sst [smem:[#allocation15]] [#allocation44]
          %559 = sst [smem:[#allocation16]] [#allocation43]
        $region112: #{tpu_custom_call.1} parent=43 // pred_fallthru
          _
        %561 = shalt.err (0)
        %s563 = sshll.u32 %s555, 4
        %s564 = int_to_ptr.vmem [resolvable:$true] %s563
        %566 = dma.hbm_to_vmem [thread:$0]  %s554, 16, %s564, [#allocation4]
        %s567 = sadd.s32 %s268, 15
        %s568 = sld [smem:[#allocation6 + %s567]]
        %p569 = scmp.gt.s32.totalorder %s568, 0
        %s570 = scalar_select %p569, %s568, 0
        %p571 = scmp.lt.s32.totalorder %s570, 63
        %s572 = scalar_select %p571, %s570, 63
        %s573 = smul.addr %s572, 16
        %s574 = scalar_lea.hbm %s1, %s573
        %s575 = scalar_lea.vmem [#allocation2], 15
        // Predicated region
        $region113: #{tpu_custom_call.1} parent=43 // pred_check
          _
        $region114: #{tpu_custom_call.1} parent=43 // pred_check_branch
          %577 = sbr.rel target = $region116
        $region115: #{tpu_custom_call.1} parent=43 // pred_region
          %578 = sst [smem:[#allocation15]] [#allocation46]
          %579 = sst [smem:[#allocation16]] [#allocation45]
        $region116: #{tpu_custom_call.1} parent=43 // pred_fallthru
          _
        %581 = shalt.err (0)
        %s583 = sshll.u32 %s575, 4
        %s584 = int_to_ptr.vmem [resolvable:$true] %s583
        %586 = dma.hbm_to_vmem [thread:$0]  %s574, 16, %s584, [#allocation4]
        %587 = vst [vmem:[#allocation3] sm:$0xff] 0.0
        %s588 = smul.u32 1, 1
        %s589 = sshll.u32 %s588, 4
        %590 = dma.done [#allocation4], %s589
        %s591 = sshll.u32 %s588, 4
        %592 = dma.done [#allocation4], %s591
        %s593 = sshll.u32 %s588, 4
        %594 = dma.done [#allocation4], %s593
        %s595 = sshll.u32 %s588, 4
        %596 = dma.done [#allocation4], %s595
        %s597 = sshll.u32 %s588, 4
        %598 = dma.done [#allocation4], %s597
        %s599 = sshll.u32 %s588, 4
        %600 = dma.done [#allocation4], %s599
        %s601 = sshll.u32 %s588, 4
        %602 = dma.done [#allocation4], %s601
        %s603 = sshll.u32 %s588, 4
        %604 = dma.done [#allocation4], %s603
        %s605 = sshll.u32 %s588, 4
        %606 = dma.done [#allocation4], %s605
        %s607 = sshll.u32 %s588, 4
        %608 = dma.done [#allocation4], %s607
        %s609 = sshll.u32 %s588, 4
        %610 = dma.done [#allocation4], %s609
        %s611 = sshll.u32 %s588, 4
        %612 = dma.done [#allocation4], %s611
        %s613 = sshll.u32 %s588, 4
        %614 = dma.done [#allocation4], %s613
        %s615 = sshll.u32 %s588, 4
        %616 = dma.done [#allocation4], %s615
        %s617 = sshll.u32 %s588, 4
        %618 = dma.done [#allocation4], %s617
        %s619 = sshll.u32 %s588, 4
        %620 = dma.done [#allocation4], %s619
        %v621 = vld [vmem:[#allocation2] sm:$0xff]
        %v622 = vld [vmem:[#allocation2 + $0x8] sm:$0xff]
        %623 = vst [vmem:[#allocation3 + $0x8] sm:$0xff] %v621
        %624 = vst [vmem:[#allocation3 + $0x10] sm:$0xff] %v622
        %v625 = vld [vmem:[#allocation3 + $0x6] sm:$0xff]
        %v626 = vld [vmem:[#allocation3 + $0xe] sm:$0xff]
        %v627 = vld [vmem:[#allocation3 + $0x7] sm:$0xff]
        %v628 = vld [vmem:[#allocation3 + $0xf] sm:$0xff]
        %v629 = vld [vmem:[#allocation3 + $0x8] sm:$0xff]
        %v630 = vld [vmem:[#allocation3 + $0x10] sm:$0xff]
        %v631 = vpack.c.bf16 %v626, %v625
        %v632 = vpack.c.bf16 %v628, %v627
        %v633 = vpack.c.bf16 %v630, %v629
        %v634 = vld [vmem:[#allocation7] sm:$0xf]
        %v635 = vld [vmem:[#allocation7 + $0x4] sm:$0xf]
        %v636 = vld [vmem:[#allocation7 + $0x8] sm:$0xf]
        %v637 = vld [vmem:[#allocation7 + $0xc] sm:$0xf]
        %v638 = vld [vmem:[#allocation7 + $0x10] sm:$0xf]
        %v639 = vld [vmem:[#allocation7 + $0x14] sm:$0xf]
        %v640 = vld [vmem:[#allocation7 + $0x18] sm:$0xf]
        %v641 = vld [vmem:[#allocation7 + $0x1c] sm:$0xf]
        %v642 = vld [vmem:[#allocation7 + $0x20] sm:$0xf]
        %v643 = vld [vmem:[#allocation7 + $0x24] sm:$0xf]
        %v644 = vld [vmem:[#allocation7 + $0x28] sm:$0xf]
        %v645 = vld [vmem:[#allocation7 + $0x2c] sm:$0xf]
        %v646 = vld [vmem:[#allocation7 + $0x30] sm:$0xf]
        %v647 = vld [vmem:[#allocation7 + $0x34] sm:$0xf]
        %v648 = vld [vmem:[#allocation7 + $0x38] sm:$0xf]
        %v649 = vld [vmem:[#allocation7 + $0x3c] sm:$0xf]
        %v650 = vld [vmem:[#allocation7 + $0x40] sm:$0xf]
        %v651 = vld [vmem:[#allocation7 + $0x44] sm:$0xf]
        %v652 = vld [vmem:[#allocation7 + $0x48] sm:$0xf]
        %v653 = vld [vmem:[#allocation7 + $0x4c] sm:$0xf]
        %v654 = vld [vmem:[#allocation7 + $0x50] sm:$0xf]
        %v655 = vld [vmem:[#allocation7 + $0x54] sm:$0xf]
        %v656 = vld [vmem:[#allocation7 + $0x58] sm:$0xf]
        %v657 = vld [vmem:[#allocation7 + $0x5c] sm:$0xf]
        %v658 = vld [vmem:[#allocation7 + $0x60] sm:$0xf]
        %v659 = vld [vmem:[#allocation7 + $0x64] sm:$0xf]
        %v660 = vld [vmem:[#allocation7 + $0x68] sm:$0xf]
        %v661 = vld [vmem:[#allocation7 + $0x6c] sm:$0xf]
        %v662 = vld [vmem:[#allocation7 + $0x70] sm:$0xf]
        %v663 = vld [vmem:[#allocation7 + $0x74] sm:$0xf]
        %v664 = vld [vmem:[#allocation7 + $0x78] sm:$0xf]
        %v665 = vld [vmem:[#allocation7 + $0x7c] sm:$0xf]
        %v666 = vld [vmem:[#allocation7 + $0x80] sm:$0xf]
        %v667 = vld [vmem:[#allocation7 + $0x84] sm:$0xf]
        %v668 = vld [vmem:[#allocation7 + $0x88] sm:$0xf]
        %v669 = vld [vmem:[#allocation7 + $0x8c] sm:$0xf]
        %v670 = vld [vmem:[#allocation7 + $0x90] sm:$0xf]
        %v671 = vld [vmem:[#allocation7 + $0x94] sm:$0xf]
        %v672 = vld [vmem:[#allocation7 + $0x98] sm:$0xf]
        %v673 = vld [vmem:[#allocation7 + $0x9c] sm:$0xf]
        %v674 = vld [vmem:[#allocation7 + $0xa0] sm:$0xf]
        %v675 = vld [vmem:[#allocation7 + $0xa4] sm:$0xf]
        %v676 = vld [vmem:[#allocation7 + $0xa8] sm:$0xf]
        %v677 = vld [vmem:[#allocation7 + $0xac] sm:$0xf]
        %v678 = vld [vmem:[#allocation7 + $0xb0] sm:$0xf]
        %v679 = vld [vmem:[#allocation7 + $0xb4] sm:$0xf]
        %v680 = vld [vmem:[#allocation7 + $0xb8] sm:$0xf]
        %v681 = vld [vmem:[#allocation7 + $0xbc] sm:$0xf]
        %v682 = vld [vmem:[%s3] sm:$0x1]
        %v684 = vlaneseq
        %v685 = vshrl.u32 %v684, 7
        %v686 = vsub.s32 0, %v685
        %v687 = vrot.slane %v682, %v686
        %v737 = vunpack.c.l.b16 %v634
        %v738 = vunpack.c.l.b16 %v635
        %v739 = vunpack.c.l.b16 %v636
        %v740 = vunpack.c.l.b16 %v637
        %v741 = vunpack.c.l.b16 %v638
        %v742 = vunpack.c.l.b16 %v639
        %v743 = vunpack.c.l.b16 %v640
        %v744 = vunpack.c.l.b16 %v641
        %v745 = vunpack.c.l.b16 %v642
        %v746 = vunpack.c.l.b16 %v643
        %v747 = vunpack.c.l.b16 %v644
        %v748 = vunpack.c.l.b16 %v645
        %v749 = vunpack.c.l.b16 %v646
        %v750 = vunpack.c.l.b16 %v647
        %v751 = vunpack.c.l.b16 %v648
        %v752 = vunpack.c.l.b16 %v649
        %v753 = vunpack.c.l.b16 %v650
        %v754 = vunpack.c.l.b16 %v651
        %v755 = vunpack.c.l.b16 %v652
        %v756 = vunpack.c.l.b16 %v653
        %v757 = vunpack.c.l.b16 %v654
        %v758 = vunpack.c.l.b16 %v655
        %v759 = vunpack.c.l.b16 %v656
        %v760 = vunpack.c.l.b16 %v657
        %v761 = vunpack.c.l.b16 %v658
        %v762 = vunpack.c.l.b16 %v659
        %v763 = vunpack.c.l.b16 %v660
        %v764 = vunpack.c.l.b16 %v661
        %v765 = vunpack.c.l.b16 %v662
        %v766 = vunpack.c.l.b16 %v663
        %v767 = vunpack.c.l.b16 %v664
        %v768 = vunpack.c.l.b16 %v665
        %v769 = vunpack.c.l.b16 %v666
        %v770 = vunpack.c.l.b16 %v667
        %v771 = vunpack.c.l.b16 %v668
        %v772 = vunpack.c.l.b16 %v669
        %v773 = vunpack.c.l.b16 %v670
        %v774 = vunpack.c.l.b16 %v671
        %v775 = vunpack.c.l.b16 %v672
        %v776 = vunpack.c.l.b16 %v673
        %v777 = vunpack.c.l.b16 %v674
        %v778 = vunpack.c.l.b16 %v675
        %v779 = vunpack.c.l.b16 %v676
        %v780 = vunpack.c.l.b16 %v677
        %v781 = vunpack.c.l.b16 %v678
        %v782 = vunpack.c.l.b16 %v679
        %v783 = vunpack.c.l.b16 %v680
        %v784 = vunpack.c.l.b16 %v681
        %v785 = vpack.c.b16 %v738, %v737
        %v786 = vpack.c.b16 %v740, %v739
        %v787 = vpack.c.b16 %v742, %v741
        %v788 = vpack.c.b16 %v744, %v743
        %v789 = vpack.c.b16 %v746, %v745
        %v790 = vpack.c.b16 %v748, %v747
        %v791 = vpack.c.b16 %v750, %v749
        %v792 = vpack.c.b16 %v752, %v751
        %v793 = vpack.c.b16 %v754, %v753
        %v794 = vpack.c.b16 %v756, %v755
        %v795 = vpack.c.b16 %v758, %v757
        %v796 = vpack.c.b16 %v760, %v759
        %v797 = vpack.c.b16 %v762, %v761
        %v798 = vpack.c.b16 %v764, %v763
        %v799 = vpack.c.b16 %v766, %v765
        %v800 = vpack.c.b16 %v768, %v767
        %v801 = vpack.c.b16 %v770, %v769
        %v802 = vpack.c.b16 %v772, %v771
        %v803 = vpack.c.b16 %v774, %v773
        %v804 = vpack.c.b16 %v776, %v775
        %v805 = vpack.c.b16 %v778, %v777
        %v806 = vpack.c.b16 %v780, %v779
        %v807 = vpack.c.b16 %v782, %v781
        %v808 = vpack.c.b16 %v784, %v783
        %833 = vmatprep.subr.bf16.mxu0 0
        %834 = vmatpush1.bf16.msra.mxu0 %v785
        %835 = vmatprep.subr.bf16.mxu0 0
        %836 = vmatpush1.bf16.msra.mxu0 %v786
        %837 = vmatprep.subr.bf16.mxu0 0
        %838 = vmatpush1.bf16.msra.mxu0 %v787
        %839 = vmatprep.subr.bf16.mxu0 0
        %840 = vmatpush1.bf16.msra.mxu0 %v788
        %841 = vmatprep.subr.bf16.mxu0 0
        %842 = vmatpush1.bf16.msra.mxu0 %v789
        %843 = vmatprep.subr.bf16.mxu0 0
        %844 = vmatpush1.bf16.msra.mxu0 %v790
        %845 = vmatprep.subr.bf16.mxu0 0
        %846 = vmatpush1.bf16.msra.mxu0 %v791
        %847 = vmatprep.subr.bf16.mxu0 0
        %848 = vmatpush1.bf16.msra.mxu0 %v792
        %849 = vmatprep.subr.bf16.mxu0 0
        %850 = vmatpush1.bf16.msra.mxu0 %v793
        %851 = vmatprep.subr.bf16.mxu0 0
        %852 = vmatpush1.bf16.msra.mxu0 %v794
        %853 = vmatprep.subr.bf16.mxu0 0
        %854 = vmatpush1.bf16.msra.mxu0 %v795
        %855 = vmatprep.subr.bf16.mxu0 0
        %856 = vmatpush1.bf16.msra.mxu0 %v796
        %857 = vmatprep.subr.bf16.mxu0 0
        %858 = vmatpush1.bf16.msra.mxu0 %v797
        %859 = vmatprep.subr.bf16.mxu0 0
        %860 = vmatpush1.bf16.msra.mxu0 %v798
        %861 = vmatprep.subr.bf16.mxu0 0
        %862 = vmatpush1.bf16.msra.mxu0 %v799
        %863 = vmatprep.subr.bf16.mxu0 0
        %864 = vmatpush1.bf16.msra.mxu0 %v800
        %865 = vmatprep.mubr.bf16.mxu0 %v632
        %866 = vmatmul.mubr.bf16.gmra.mrb[0].mxu0 %v631
        %v867 = vpop.f32.mrb[0].mxu0
        %v868 = vadd.f32 %v687, %v867
        %v869 = vpop.f32.mrb[0].mxu0
        %v870 = vpop.f32.mrb[0].mxu0
        %v871 = vadd.f32 %v687, %v870
        %v872 = vpop.f32.mrb[0].mxu0
        %873 = vdwg.mxu0
        %874 = vmatprep.subr.bf16.mxu0 0
        %875 = vmatpush1.bf16.msra.mxu0 %v801
        %876 = vmatprep.subr.bf16.mxu0 0
        %877 = vmatpush1.bf16.msra.mxu0 %v802
        %878 = vmatprep.subr.bf16.mxu0 0
        %879 = vmatpush1.bf16.msra.mxu0 %v803
        %880 = vmatprep.subr.bf16.mxu0 0
        %881 = vmatpush1.bf16.msra.mxu0 %v804
        %882 = vmatprep.subr.bf16.mxu0 0
        %883 = vmatpush1.bf16.msra.mxu0 %v805
        %884 = vmatprep.subr.bf16.mxu0 0
        %885 = vmatpush1.bf16.msra.mxu0 %v806
        %886 = vmatprep.subr.bf16.mxu0 0
        %887 = vmatpush1.bf16.msra.mxu0 %v807
        %888 = vmatprep.subr.bf16.mxu0 0
        %889 = vmatpush1.bf16.msra.mxu0 %v808
        %890 = vmatprep.subr.bf16.mxu0 0
        %891 = vmatpush1.bf16.msra.mxu0 0
        %892 = vmatprep.subr.bf16.mxu0 0
        %893 = vmatpush1.bf16.msra.mxu0 0
        %894 = vmatprep.subr.bf16.mxu0 0
        %895 = vmatpush1.bf16.msra.mxu0 0
        %896 = vmatprep.subr.bf16.mxu0 0
        %897 = vmatpush1.bf16.msra.mxu0 0
        %898 = vmatprep.subr.bf16.mxu0 0
        %899 = vmatpush1.bf16.msra.mxu0 0
        %900 = vmatprep.subr.bf16.mxu0 0
        %901 = vmatpush1.bf16.msra.mxu0 0
        %902 = vmatprep.subr.bf16.mxu0 0
        %903 = vmatpush1.bf16.msra.mxu0 0
        %904 = vmatprep.subr.bf16.mxu0 0
        %905 = vmatpush1.bf16.msra.mxu0 0
        %906 = vmatprep.mubr.bf16.mxu0 0
        %907 = vmatmul.mubr.bf16.gmra.mrb[0].mxu0 %v633
        %v908 = vpop.f32.mrb[0].mxu0
        %v909 = vadd.f32 %v868, %v908
        %v910 = vpop.f32.mrb[0].mxu0
        %v911 = vpop.f32.mrb[0].mxu0
        %v912 = vadd.f32 %v871, %v911
        %v913 = vpop.f32.mrb[0].mxu0
        %914 = vdwg.mxu0
        %v915 = vmax.f32 %v909, 0.0
        %v916 = vmax.f32 %v912, 0.0
        %917 = vadd.xlane.f32.xlu0 %v915
        %v918 = vpop.xlane.xlu0 %917
        %919 = vadd.xlane.f32.xlu0 %v916
        %v920 = vpop.xlane.xlu0 %919
        %v921 = vmul.f32 %v915, %v915
        %v922 = vmul.f32 %v916, %v916
        %923 = vadd.xlane.f32.xlu0 %v921
        %v924 = vpop.xlane.xlu0 %923
        %925 = vadd.xlane.f32.xlu0 %v922
        %v926 = vpop.xlane.xlu0 %925
        %v927 = vmul.f32 %v918, 0.03125
        %v928 = vmul.f32 %v920, 0.03125
        %v929 = vmul.f32 %v924, 0.03125
        %v930 = vmul.f32 %v926, 0.03125
        %v931 = vmul.f32 %v927, %v927
        %v932 = vmul.f32 %v928, %v928
        %v933 = vsub.f32 %v929, %v931
        %v934 = vsub.f32 %v930, %v932
        %v935 = vmax.f32 %v933, 0.0
        %v936 = vmax.f32 %v934, 0.0
        %v937 = vsub.f32 %v915, %v927
        %v938 = vsub.f32 %v916, %v928
        %v939 = vadd.f32 %v935, 1e-05
        %v940 = vadd.f32 %v936, 1e-05
        %v941 = vrsqrt.pop %v939
        %v942 = vrsqrt.pop %v940
        %v943 = vmul.f32 %v937, %v941
        %v944 = vmul.f32 %v938, %v942
        %v945 = vld [vmem:[%s4] sm:$0x1]
        %v947 = vlaneseq
        %v948 = vshrl.u32 %v947, 7
        %v949 = vsub.s32 0, %v948
        %v950 = vrot.slane %v945, %v949
        %v952 = vmul.f32 %v943, %v950
        %v953 = vmul.f32 %v944, %v950
        %v954 = vld [vmem:[%s5] sm:$0x1]
        %v956 = vlaneseq
        %v957 = vshrl.u32 %v956, 7
        %v958 = vsub.s32 0, %v957
        %v959 = vrot.slane %v954, %v958
        %v961 = vadd.f32 %v952, %v959
        %v962 = vadd.f32 %v953, %v959
        %963 = vst [vmem:[#allocation3 + $0x8] sm:$0xff] %v961
        %964 = vst [vmem:[#allocation3 + $0x10] sm:$0xff] %v962
        %v965 = vld [vmem:[#allocation3 + $0x6] sm:$0xff]
        %v966 = vld [vmem:[#allocation3 + $0xe] sm:$0xff]
        %v967 = vld [vmem:[#allocation3 + $0x7] sm:$0xff]
        %v968 = vld [vmem:[#allocation3 + $0xf] sm:$0xff]
        %v969 = vld [vmem:[#allocation3 + $0x8] sm:$0xff]
        %v970 = vld [vmem:[#allocation3 + $0x10] sm:$0xff]
        %v971 = vpack.c.bf16 %v966, %v965
        %v972 = vpack.c.bf16 %v968, %v967
        %v973 = vpack.c.bf16 %v970, %v969
        %s974 = scalar_lea.vmem [#allocation7], 192
        %v975 = vld [vmem:[%s974] sm:$0xf]
        %v976 = vld [vmem:[%s974 + $0x4] sm:$0xf]
        %v977 = vld [vmem:[%s974 + $0x8] sm:$0xf]
        %v978 = vld [vmem:[%s974 + $0xc] sm:$0xf]
        %v979 = vld [vmem:[%s974 + $0x10] sm:$0xf]
        %v980 = vld [vmem:[%s974 + $0x14] sm:$0xf]
        %v981 = vld [vmem:[%s974 + $0x18] sm:$0xf]
        %v982 = vld [vmem:[%s974 + $0x1c] sm:$0xf]
        %v983 = vld [vmem:[%s974 + $0x20] sm:$0xf]
        %v984 = vld [vmem:[%s974 + $0x24] sm:$0xf]
        %v985 = vld [vmem:[%s974 + $0x28] sm:$0xf]
        %v986 = vld [vmem:[%s974 + $0x2c] sm:$0xf]
        %v987 = vld [vmem:[%s974 + $0x30] sm:$0xf]
        %v988 = vld [vmem:[%s974 + $0x34] sm:$0xf]
        %v989 = vld [vmem:[%s974 + $0x38] sm:$0xf]
        %v990 = vld [vmem:[%s974 + $0x3c] sm:$0xf]
        %v991 = vld [vmem:[%s974 + $0x40] sm:$0xf]
        %v992 = vld [vmem:[%s974 + $0x44] sm:$0xf]
        %v993 = vld [vmem:[%s974 + $0x48] sm:$0xf]
        %v994 = vld [vmem:[%s974 + $0x4c] sm:$0xf]
        %v995 = vld [vmem:[%s974 + $0x50] sm:$0xf]
        %v996 = vld [vmem:[%s974 + $0x54] sm:$0xf]
        %v997 = vld [vmem:[%s974 + $0x58] sm:$0xf]
        %v998 = vld [vmem:[%s974 + $0x5c] sm:$0xf]
        %v999 = vld [vmem:[%s974 + $0x60] sm:$0xf]
        %v1000 = vld [vmem:[%s974 + $0x64] sm:$0xf]
        %v1001 = vld [vmem:[%s974 + $0x68] sm:$0xf]
        %v1002 = vld [vmem:[%s974 + $0x6c] sm:$0xf]
        %v1003 = vld [vmem:[%s974 + $0x70] sm:$0xf]
        %v1004 = vld [vmem:[%s974 + $0x74] sm:$0xf]
        %v1005 = vld [vmem:[%s974 + $0x78] sm:$0xf]
        %v1006 = vld [vmem:[%s974 + $0x7c] sm:$0xf]
        %v1007 = vld [vmem:[%s974 + $0x80] sm:$0xf]
        %v1008 = vld [vmem:[%s974 + $0x84] sm:$0xf]
        %v1009 = vld [vmem:[%s974 + $0x88] sm:$0xf]
        %v1010 = vld [vmem:[%s974 + $0x8c] sm:$0xf]
        %v1011 = vld [vmem:[%s974 + $0x90] sm:$0xf]
        %v1012 = vld [vmem:[%s974 + $0x94] sm:$0xf]
        %v1013 = vld [vmem:[%s974 + $0x98] sm:$0xf]
        %v1014 = vld [vmem:[%s974 + $0x9c] sm:$0xf]
        %v1015 = vld [vmem:[%s974 + $0xa0] sm:$0xf]
        %v1016 = vld [vmem:[%s974 + $0xa4] sm:$0xf]
        %v1017 = vld [vmem:[%s974 + $0xa8] sm:$0xf]
        %v1018 = vld [vmem:[%s974 + $0xac] sm:$0xf]
        %v1019 = vld [vmem:[%s974 + $0xb0] sm:$0xf]
        %v1020 = vld [vmem:[%s974 + $0xb4] sm:$0xf]
        %v1021 = vld [vmem:[%s974 + $0xb8] sm:$0xf]
        %v1022 = vld [vmem:[%s974 + $0xbc] sm:$0xf]
        %s1023 = scalar_lea.vmem %s3, 1
        %v1024 = vld [vmem:[%s1023] sm:$0x1]
        %v1026 = vlaneseq
        %v1027 = vshrl.u32 %v1026, 7
        %v1028 = vsub.s32 0, %v1027
        %v1029 = vrot.slane %v1024, %v1028
        %v1079 = vunpack.c.l.b16 %v975
        %v1080 = vunpack.c.l.b16 %v976
        %v1081 = vunpack.c.l.b16 %v977
        %v1082 = vunpack.c.l.b16 %v978
        %v1083 = vunpack.c.l.b16 %v979
        %v1084 = vunpack.c.l.b16 %v980
        %v1085 = vunpack.c.l.b16 %v981
        %v1086 = vunpack.c.l.b16 %v982
        %v1087 = vunpack.c.l.b16 %v983
        %v1088 = vunpack.c.l.b16 %v984
        %v1089 = vunpack.c.l.b16 %v985
        %v1090 = vunpack.c.l.b16 %v986
        %v1091 = vunpack.c.l.b16 %v987
        %v1092 = vunpack.c.l.b16 %v988
        %v1093 = vunpack.c.l.b16 %v989
        %v1094 = vunpack.c.l.b16 %v990
        %v1095 = vunpack.c.l.b16 %v991
        %v1096 = vunpack.c.l.b16 %v992
        %v1097 = vunpack.c.l.b16 %v993
        %v1098 = vunpack.c.l.b16 %v994
        %v1099 = vunpack.c.l.b16 %v995
        %v1100 = vunpack.c.l.b16 %v996
        %v1101 = vunpack.c.l.b16 %v997
        %v1102 = vunpack.c.l.b16 %v998
        %v1103 = vunpack.c.l.b16 %v999
        %v1104 = vunpack.c.l.b16 %v1000
        %v1105 = vunpack.c.l.b16 %v1001
        %v1106 = vunpack.c.l.b16 %v1002
        %v1107 = vunpack.c.l.b16 %v1003
        %v1108 = vunpack.c.l.b16 %v1004
        %v1109 = vunpack.c.l.b16 %v1005
        %v1110 = vunpack.c.l.b16 %v1006
        %v1111 = vunpack.c.l.b16 %v1007
        %v1112 = vunpack.c.l.b16 %v1008
        %v1113 = vunpack.c.l.b16 %v1009
        %v1114 = vunpack.c.l.b16 %v1010
        %v1115 = vunpack.c.l.b16 %v1011
        %v1116 = vunpack.c.l.b16 %v1012
        %v1117 = vunpack.c.l.b16 %v1013
        %v1118 = vunpack.c.l.b16 %v1014
        %v1119 = vunpack.c.l.b16 %v1015
        %v1120 = vunpack.c.l.b16 %v1016
        %v1121 = vunpack.c.l.b16 %v1017
        %v1122 = vunpack.c.l.b16 %v1018
        %v1123 = vunpack.c.l.b16 %v1019
        %v1124 = vunpack.c.l.b16 %v1020
        %v1125 = vunpack.c.l.b16 %v1021
        %v1126 = vunpack.c.l.b16 %v1022
        %v1127 = vpack.c.b16 %v1080, %v1079
        %v1128 = vpack.c.b16 %v1082, %v1081
        %v1129 = vpack.c.b16 %v1084, %v1083
        %v1130 = vpack.c.b16 %v1086, %v1085
        %v1131 = vpack.c.b16 %v1088, %v1087
        %v1132 = vpack.c.b16 %v1090, %v1089
        %v1133 = vpack.c.b16 %v1092, %v1091
        %v1134 = vpack.c.b16 %v1094, %v1093
        %v1135 = vpack.c.b16 %v1096, %v1095
        %v1136 = vpack.c.b16 %v1098, %v1097
        %v1137 = vpack.c.b16 %v1100, %v1099
        %v1138 = vpack.c.b16 %v1102, %v1101
        %v1139 = vpack.c.b16 %v1104, %v1103
        %v1140 = vpack.c.b16 %v1106, %v1105
        %v1141 = vpack.c.b16 %v1108, %v1107
        %v1142 = vpack.c.b16 %v1110, %v1109
        %v1143 = vpack.c.b16 %v1112, %v1111
        %v1144 = vpack.c.b16 %v1114, %v1113
        %v1145 = vpack.c.b16 %v1116, %v1115
        %v1146 = vpack.c.b16 %v1118, %v1117
        %v1147 = vpack.c.b16 %v1120, %v1119
        %v1148 = vpack.c.b16 %v1122, %v1121
        %v1149 = vpack.c.b16 %v1124, %v1123
        %v1150 = vpack.c.b16 %v1126, %v1125
        %1175 = vmatprep.subr.bf16.mxu0 0
        %1176 = vmatpush1.bf16.msra.mxu0 %v1127
        %1177 = vmatprep.subr.bf16.mxu0 0
        %1178 = vmatpush1.bf16.msra.mxu0 %v1128
        %1179 = vmatprep.subr.bf16.mxu0 0
        %1180 = vmatpush1.bf16.msra.mxu0 %v1129
        %1181 = vmatprep.subr.bf16.mxu0 0
        %1182 = vmatpush1.bf16.msra.mxu0 %v1130
        %1183 = vmatprep.subr.bf16.mxu0 0
        %1184 = vmatpush1.bf16.msra.mxu0 %v1131
        %1185 = vmatprep.subr.bf16.mxu0 0
        %1186 = vmatpush1.bf16.msra.mxu0 %v1132
        %1187 = vmatprep.subr.bf16.mxu0 0
        %1188 = vmatpush1.bf16.msra.mxu0 %v1133
        %1189 = vmatprep.subr.bf16.mxu0 0
        %1190 = vmatpush1.bf16.msra.mxu0 %v1134
        %1191 = vmatprep.subr.bf16.mxu0 0
        %1192 = vmatpush1.bf16.msra.mxu0 %v1135
        %1193 = vmatprep.subr.bf16.mxu0 0
        %1194 = vmatpush1.bf16.msra.mxu0 %v1136
        %1195 = vmatprep.subr.bf16.mxu0 0
        %1196 = vmatpush1.bf16.msra.mxu0 %v1137
        %1197 = vmatprep.subr.bf16.mxu0 0
        %1198 = vmatpush1.bf16.msra.mxu0 %v1138
        %1199 = vmatprep.subr.bf16.mxu0 0
        %1200 = vmatpush1.bf16.msra.mxu0 %v1139
        %1201 = vmatprep.subr.bf16.mxu0 0
        %1202 = vmatpush1.bf16.msra.mxu0 %v1140
        %1203 = vmatprep.subr.bf16.mxu0 0
        %1204 = vmatpush1.bf16.msra.mxu0 %v1141
        %1205 = vmatprep.subr.bf16.mxu0 0
        %1206 = vmatpush1.bf16.msra.mxu0 %v1142
        %1207 = vmatprep.mubr.bf16.mxu0 %v972
        %1208 = vmatmul.mubr.bf16.gmra.mrb[0].mxu0 %v971
        %v1209 = vpop.f32.mrb[0].mxu0
        %v1210 = vadd.f32 %v1029, %v1209
        %v1211 = vpop.f32.mrb[0].mxu0
        %v1212 = vpop.f32.mrb[0].mxu0
        %v1213 = vadd.f32 %v1029, %v1212
        %v1214 = vpop.f32.mrb[0].mxu0
        %1215 = vdwg.mxu0
        %1216 = vmatprep.subr.bf16.mxu0 0
        %1217 = vmatpush1.bf16.msra.mxu0 %v1143
        %1218 = vmatprep.subr.bf16.mxu0 0
        %1219 = vmatpush1.bf16.msra.mxu0 %v1144
        %1220 = vmatprep.subr.bf16.mxu0 0
        %1221 = vmatpush1.bf16.msra.mxu0 %v1145
        %1222 = vmatprep.subr.bf16.mxu0 0
        %1223 = vmatpush1.bf16.msra.mxu0 %v1146
        %1224 = vmatprep.subr.bf16.mxu0 0
        %1225 = vmatpush1.bf16.msra.mxu0 %v1147
        %1226 = vmatprep.subr.bf16.mxu0 0
        %1227 = vmatpush1.bf16.msra.mxu0 %v1148
        %1228 = vmatprep.subr.bf16.mxu0 0
        %1229 = vmatpush1.bf16.msra.mxu0 %v1149
        %1230 = vmatprep.subr.bf16.mxu0 0
        %1231 = vmatpush1.bf16.msra.mxu0 %v1150
        %1232 = vmatprep.subr.bf16.mxu0 0
        %1233 = vmatpush1.bf16.msra.mxu0 0
        %1234 = vmatprep.subr.bf16.mxu0 0
        %1235 = vmatpush1.bf16.msra.mxu0 0
        %1236 = vmatprep.subr.bf16.mxu0 0
        %1237 = vmatpush1.bf16.msra.mxu0 0
        %1238 = vmatprep.subr.bf16.mxu0 0
        %1239 = vmatpush1.bf16.msra.mxu0 0
        %1240 = vmatprep.subr.bf16.mxu0 0
        %1241 = vmatpush1.bf16.msra.mxu0 0
        %1242 = vmatprep.subr.bf16.mxu0 0
        %1243 = vmatpush1.bf16.msra.mxu0 0
        %1244 = vmatprep.subr.bf16.mxu0 0
        %1245 = vmatpush1.bf16.msra.mxu0 0
        %1246 = vmatprep.subr.bf16.mxu0 0
        %1247 = vmatpush1.bf16.msra.mxu0 0
        %1248 = vmatprep.mubr.bf16.mxu0 0
        %1249 = vmatmul.mubr.bf16.gmra.mrb[0].mxu0 %v973
        %v1250 = vpop.f32.mrb[0].mxu0
        %v1251 = vadd.f32 %v1210, %v1250
        %v1252 = vpop.f32.mrb[0].mxu0
        %v1253 = vpop.f32.mrb[0].mxu0
        %v1254 = vadd.f32 %v1213, %v1253
        %v1255 = vpop.f32.mrb[0].mxu0
        %1256 = vdwg.mxu0
        %v1257 = vmax.f32 %v1251, 0.0
        %v1258 = vmax.f32 %v1254, 0.0
        %1259 = vadd.xlane.f32.xlu0 %v1257
        %v1260 = vpop.xlane.xlu0 %1259
        %1261 = vadd.xlane.f32.xlu0 %v1258
        %v1262 = vpop.xlane.xlu0 %1261
        %v1263 = vmul.f32 %v1257, %v1257
        %v1264 = vmul.f32 %v1258, %v1258
        %1265 = vadd.xlane.f32.xlu0 %v1263
        %v1266 = vpop.xlane.xlu0 %1265
        %1267 = vadd.xlane.f32.xlu0 %v1264
        %v1268 = vpop.xlane.xlu0 %1267
        %v1269 = vmul.f32 %v1260, 0.03125
        %v1270 = vmul.f32 %v1262, 0.03125
        %v1271 = vmul.f32 %v1266, 0.03125
        %v1272 = vmul.f32 %v1268, 0.03125
        %v1273 = vmul.f32 %v1269, %v1269
        %v1274 = vmul.f32 %v1270, %v1270
        %v1275 = vsub.f32 %v1271, %v1273
        %v1276 = vsub.f32 %v1272, %v1274
        %v1277 = vmax.f32 %v1275, 0.0
        %v1278 = vmax.f32 %v1276, 0.0
        %v1279 = vsub.f32 %v1257, %v1269
        %v1280 = vsub.f32 %v1258, %v1270
        %v1281 = vadd.f32 %v1277, 1e-05
        %v1282 = vadd.f32 %v1278, 1e-05
        %v1283 = vrsqrt.pop %v1281
        %v1284 = vrsqrt.pop %v1282
        %v1285 = vmul.f32 %v1279, %v1283
        %v1286 = vmul.f32 %v1280, %v1284
        %s1287 = scalar_lea.vmem %s4, 1
        %v1288 = vld [vmem:[%s1287] sm:$0x1]
        %v1290 = vlaneseq
        %v1291 = vshrl.u32 %v1290, 7
        %v1292 = vsub.s32 0, %v1291
        %v1293 = vrot.slane %v1288, %v1292
        %v1295 = vmul.f32 %v1285, %v1293
        %v1296 = vmul.f32 %v1286, %v1293
        %s1297 = scalar_lea.vmem %s5, 1
        %v1298 = vld [vmem:[%s1297] sm:$0x1]
        %v1300 = vlaneseq
        %v1301 = vshrl.u32 %v1300, 7
        %v1302 = vsub.s32 0, %v1301
        %v1303 = vrot.slane %v1298, %v1302
        %v1305 = vadd.f32 %v1295, %v1303
        %v1306 = vadd.f32 %v1296, %v1303
        %v1307 = vpack.c.bf16 %v1306, %v1305
        %v1308 = vld [vmem:[#allocation10] sm:$0xf]
        %v1309 = vld [vmem:[#allocation10 + $0x4] sm:$0xf]
        %v1310 = vld [vmem:[#allocation10 + $0x8] sm:$0xf]
        %v1311 = vld [vmem:[#allocation10 + $0xc] sm:$0xf]
        %v1312 = vld [vmem:[#allocation10 + $0x10] sm:$0xf]
        %v1313 = vld [vmem:[#allocation10 + $0x14] sm:$0xf]
        %v1314 = vld [vmem:[#allocation10 + $0x18] sm:$0xf]
        %v1315 = vld [vmem:[#allocation10 + $0x1c] sm:$0xf]
        %v1316 = vld [vmem:[#allocation10 + $0x20] sm:$0xf]
        %v1317 = vld [vmem:[#allocation10 + $0x24] sm:$0xf]
        %v1318 = vld [vmem:[#allocation10 + $0x28] sm:$0xf]
        %v1319 = vld [vmem:[#allocation10 + $0x2c] sm:$0xf]
        %v1320 = vld [vmem:[#allocation10 + $0x30] sm:$0xf]
        %v1321 = vld [vmem:[#allocation10 + $0x34] sm:$0xf]
        %v1322 = vld [vmem:[#allocation10 + $0x38] sm:$0xf]
        %v1323 = vld [vmem:[#allocation10 + $0x3c] sm:$0xf]
        %v1324 = vld [vmem:[%s7] sm:$0x1]
        %v1326 = vlaneseq
        %v1327 = vshrl.u32 %v1326, 7
        %v1328 = vsub.s32 0, %v1327
        %v1329 = vrot.slane %v1324, %v1328
        %v1347 = vunpack.c.l.b16 %v1308
        %v1348 = vunpack.c.l.b16 %v1309
        %v1349 = vunpack.c.l.b16 %v1310
        %v1350 = vunpack.c.l.b16 %v1311
        %v1351 = vunpack.c.l.b16 %v1312
        %v1352 = vunpack.c.l.b16 %v1313
        %v1353 = vunpack.c.l.b16 %v1314
        %v1354 = vunpack.c.l.b16 %v1315
        %v1355 = vunpack.c.l.b16 %v1316
        %v1356 = vunpack.c.l.b16 %v1317
        %v1357 = vunpack.c.l.b16 %v1318
        %v1358 = vunpack.c.l.b16 %v1319
        %v1359 = vunpack.c.l.b16 %v1320
        %v1360 = vunpack.c.l.b16 %v1321
        %v1361 = vunpack.c.l.b16 %v1322
        %v1362 = vunpack.c.l.b16 %v1323
        %v1363 = vpack.c.b16 %v1348, %v1347
        %v1364 = vpack.c.b16 %v1350, %v1349
        %v1365 = vpack.c.b16 %v1352, %v1351
        %v1366 = vpack.c.b16 %v1354, %v1353
        %v1367 = vpack.c.b16 %v1356, %v1355
        %v1368 = vpack.c.b16 %v1358, %v1357
        %v1369 = vpack.c.b16 %v1360, %v1359
        %v1370 = vpack.c.b16 %v1362, %v1361
        %1379 = vmatprep.subr.bf16.mxu0 0
        %1380 = vmatpush1.bf16.msra.mxu0 %v1363
        %1381 = vmatprep.subr.bf16.mxu0 0
        %1382 = vmatpush1.bf16.msra.mxu0 %v1364
        %1383 = vmatprep.subr.bf16.mxu0 0
        %1384 = vmatpush1.bf16.msra.mxu0 %v1365
        %1385 = vmatprep.subr.bf16.mxu0 0
        %1386 = vmatpush1.bf16.msra.mxu0 %v1366
        %1387 = vmatprep.subr.bf16.mxu0 0
        %1388 = vmatpush1.bf16.msra.mxu0 %v1367
        %1389 = vmatprep.subr.bf16.mxu0 0
        %1390 = vmatpush1.bf16.msra.mxu0 %v1368
        %1391 = vmatprep.subr.bf16.mxu0 0
        %1392 = vmatpush1.bf16.msra.mxu0 %v1369
        %1393 = vmatprep.subr.bf16.mxu0 0
        %1394 = vmatpush1.bf16.msra.mxu0 %v1370
        %1395 = vmatprep.subr.bf16.mxu0 0
        %1396 = vmatpush1.bf16.msra.mxu0 0
        %1397 = vmatprep.subr.bf16.mxu0 0
        %1398 = vmatpush1.bf16.msra.mxu0 0
        %1399 = vmatprep.subr.bf16.mxu0 0
        %1400 = vmatpush1.bf16.msra.mxu0 0
        %1401 = vmatprep.subr.bf16.mxu0 0
        %1402 = vmatpush1.bf16.msra.mxu0 0
        %1403 = vmatprep.subr.bf16.mxu0 0
        %1404 = vmatpush1.bf16.msra.mxu0 0
        %1405 = vmatprep.subr.bf16.mxu0 0
        %1406 = vmatpush1.bf16.msra.mxu0 0
        %1407 = vmatprep.subr.bf16.mxu0 0
        %1408 = vmatpush1.bf16.msra.mxu0 0
        %1409 = vmatprep.subr.bf16.mxu0 0
        %1410 = vmatpush1.bf16.msra.mxu0 0
        %1411 = vmatprep.mubr.bf16.mxu0 0
        %1412 = vmatmul.mubr.bf16.gmra.mrb[0].mxu0 %v1307
        %v1413 = vpop.f32.mrb[0].mxu0
        %v1414 = vadd.f32 %v1329, %v1413
        %v1415 = vpop.f32.mrb[0].mxu0
        %v1416 = vpop.f32.mrb[0].mxu0
        %v1417 = vadd.f32 %v1329, %v1416
        %v1418 = vpop.f32.mrb[0].mxu0
        %1419 = vdwg.mxu0
        %1420 = vst [vmem:[%s265] sm:$0xff] %v1414
        %1421 = vst [vmem:[%s265 + $0x8] sm:$0xff] %v1417
        %s1422 = sand.u32 %s162, 1
        %s1423 = scalar_lea.sflag [#allocation9], %s1422
        %s1424 = sand.u32 %s162, 1
        %s1425 = smul.addr %s1424, 16
        %s1426 = scalar_lea.vmem [#allocation12], %s1425
        // Predicated region
        $region117: #{tpu_custom_call.1} parent=43 // pred_check
          %p1427 = pneg %p172
        $region118: #{tpu_custom_call.1} parent=43 // pred_check_branch
          %1429 = sbr.rel (%p1427) target = $region120
        $region119: #{tpu_custom_call.1} parent=43 // pred_region
          %s1430 = smul.u32 2, %s28
          %s1432 = ssub.s32 256, 256
          %1433 = vsyncadd %s1423, %s1432
          %s1434 = smul.addr %s1430, 128
          %s1435 = scalar_lea.hbm %s8, %s1434
          %s1436 = sshll.u32 %s1426, 4
          %s1437 = int_to_ptr.vmem [resolvable:$true] %s1436
          %1442 = dma.vmem_to_hbm [thread:$0]  %s1437, 256, %s1435, %s1423, 128, 128, 8
        $region120: #{tpu_custom_call.1} parent=43 // pred_fallthru
          _
      $region44: #{tpu_custom_call.1} parent=5 // pred_fallthru
        _
      %p1443 = scmp.le.s32.totalorder 2, %s23
      // Predicated region
      $region121: #{tpu_custom_call.1} parent=5 // pred_check
        %p1444 = pneg %p1443
      $region122: #{tpu_custom_call.1} parent=5 // pred_check_branch
        %1446 = sbr.rel (%p1444) target = $region124
      $region123: #{tpu_custom_call.1} parent=5 // pred_region
        %s1447 = ssub.s32 %s23, 2
        // Predicated region
        $region125: #{tpu_custom_call.1} parent=123 // pred_check
          %p1448 = pneg %p178
        $region126: #{tpu_custom_call.1} parent=123 // pred_check_branch
          %1450 = sbr.rel (%p1448) target = $region128
        $region127: #{tpu_custom_call.1} parent=123 // pred_region
          %s1451 = sand.u32 %s163, 1
          %s1452 = scalar_lea.sflag [#allocation9], %s1451
          %s1453 = sand.u32 %s163, 1
          %s1454 = smul.addr %s1453, 16
          %s1455 = scalar_lea.vmem [#allocation12], %s1454
          %1456 = dma.done %s1452, 256
        $region128: #{tpu_custom_call.1} parent=123 // pred_fallthru
          _
      $region124: #{tpu_custom_call.1} parent=5 // pred_fallthru
        _
    $region6: #{tpu_custom_call.1} parent=1 // loop_footer
      %s27 = sadd.s32 1, %s23
    $region7: #{tpu_custom_call.1} parent=1 // loop_footer_branch
      %22 = sbr.rel target = $region3
    $region8: #{tpu_custom_call.1} parent=1 // loop_exit
      _
    %1457 = vsyncpa [#allocation8], 1
    %s1458 = scalar_lea.sflag [#allocation8], 1
    %1459 = vsyncpa %s1458, 1
    %1460 = vsyncpa [#allocation11], 1
    %1461 = vsyncpa [#allocation9], 1
    %s1462 = scalar_lea.sflag [#allocation9], 1
    %1463 = vsyncpa %s1462, 1
  %1464 = vsyncmov [#allocation4]
  %s1465 = vpop.sfrf %1464
  %p1466 = scmp.eq.s32.totalorder %s1465, 0
  %p1467 = pneg %p1466
  %1469 = shalt.err (%p1467)

</llo_original>
